<compile_context>
chip_gen: v5e
topology: v5e:2x2
jax: 0.10.0
libtpu: 0.0.40
codegen_flags: <defaults>
</compile_context>

<pallas_src>
import functools

import jax
import jax.numpy as jnp
from jax.experimental import pallas as pl
from jax.experimental.pallas import tpu as pltpu


def _round_up(x, m):
    return (x + m - 1) // m * m


# -----------------------------------------------------------------------------
# Fused kernel: depthwise KxK (VPU) + pointwise 1x1 (MXU) for one row tile.
# -----------------------------------------------------------------------------
def _sepconv_kernel(x_ref, wd_ref, bd_ref, wp_ref, bp_ref, o_ref, *, dilation):
    # x_ref : (1, HPP, WPP, C)   zero-padded input image (one batch element)
    # wd_ref: (dm, KH, KW, C)    depthwise filters, grouped by depth-multiplier j
    # bd_ref: (dm, C)            depthwise bias, same grouping
    # wp_ref: (dm, C, Cp)        pointwise weight rows matching the (j, c) grouping
    # bp_ref: (1, Cp)            pointwise bias (lane-padded)
    # o_ref : (1, TR, OWp, Cp)   one tile of TR output rows (lane-dense: Cp % 128 == 0)
    dm, KH, KW, C = wd_ref.shape
    TR, OWp, Cp = o_ref.shape[1], o_ref.shape[2], o_ref.shape[3]

    r = pl.program_id(1)
    row0 = pl.multiple_of(r * TR, TR)          # first output row of this tile

    out = jnp.zeros((TR * OWp, Cp), jnp.float32)
    for j in range(dm):                        # depth_multiplier groups (usually 1)
        wd_j = wd_ref[j].astype(jnp.float32)   # (KH, KW, C) — hoisted once
        acc = jnp.zeros((TR, OWp, C), jnp.float32)
        for kh in range(KH):                   # static unroll: KH*KW VPU FMAs,
            for kw in range(KW):               # accumulator stays in registers
                xo = x_ref[0,
                           pl.ds(row0 + kh * dilation, TR),
                           pl.ds(kw * dilation, OWp), :]
                acc = acc + xo.astype(jnp.float32) * wd_j[kh:kh + 1, kw:kw + 1, :]
        acc = acc + bd_ref[j:j + 1, :].astype(jnp.float32).reshape(1, 1, C)
        # fused pointwise 1x1: (TR*OWp, C) @ (C, Cp) on the MXU, f32 accumulate
        out = out + jnp.dot(acc.reshape(TR * OWp, C),
                            wp_ref[j].astype(jnp.float32),
                            preferred_element_type=jnp.float32)
    out = out + bp_ref[...].astype(jnp.float32)
    o_ref[0] = out.reshape(TR, OWp, Cp).astype(o_ref.dtype)


# -----------------------------------------------------------------------------
# Wrapper: full SeparableConv2d forward (NCHW in, NCHW out, PyTorch weights).
# -----------------------------------------------------------------------------
def separable_conv2d(x, w_dw, b_dw, w_pw, b_pw, *,
                     stride=1, padding=0, dilation=1, depth_multiplier=1):
    """x: (N,C,H,W); w_dw: (C*dm,1,KH,KW); b_dw: (C*dm,);
       w_pw: (Cout,C*dm,1,1); b_pw: (Cout,).  Returns (N,Cout,OH,OW)."""
    # TODO(synk): stride > 1 would need strided output-row/col indexing in the kernel.
    assert stride == 1, "only stride=1 (the module default) is implemented"

    N, C, H, W = x.shape
    dm = depth_multiplier
    Cmid = w_dw.shape[0]
    KH, KW = int(w_dw.shape[2]), int(w_dw.shape[3])
    Cout = w_pw.shape[0]
    assert Cmid == C * dm

    HP, WP = H + 2 * padding, W + 2 * padding
    OH = HP - dilation * (KH - 1)
    OW = WP - dilation * (KW - 1)
    OWp = _round_up(OW, 8)        # aligned in-kernel reshapes / sublane tiles
    Cp = _round_up(Cout, 128)     # lane-dense output stores (no masked vst)

    # ---- row-tile size: keep the f32 accumulator ~vreg-resident and the
    #      double-buffered f32 output tile a few MiB ----
    tr = min(OH,
             max(1, (256 * 1024) // (OWp * max(C, 1) * 4)),
             max(1, (2 * 1024 * 1024) // (OWp * Cp * 8)))
    if N == 1 and OH >= 2:
        tr = min(tr, (OH + 1) // 2)   # >=2 row tiles: keep both v7x TCs busy
    R = (OH + tr - 1) // tr

    # ---- layout plumbing (wrapper-side only) ----
    # TODO(synk): accepting/emitting NHWC at the op boundary would remove these
    # two HBM transpose passes for NHWC-native models.
    x_nhwc = jnp.transpose(x, (0, 2, 3, 1))                       # (N, H, W, C)
    HPP = R * tr + dilation * (KH - 1)     # last (masked) tile never reads OOB
    WPP = OWp + dilation * (KW - 1)
    pad_h = (padding, padding + (HPP - HP))
    pad_w = (padding, padding + (WPP - WP))
    if any(p for p in pad_h + pad_w):
        x_nhwc = jnp.pad(x_nhwc, ((0, 0), pad_h, pad_w, (0, 0)))

    # depthwise weights: out-channel index = c*dm + j  ->  group by j
    w_dw_g = jnp.transpose(w_dw.reshape(C, dm, KH, KW), (1, 2, 3, 0))  # (dm,KH,KW,C)
    b_dw_g = b_dw.reshape(C, dm).T                                     # (dm, C)
    # pointwise weights: input channel index = c*dm + j  ->  (dm, C, Cout), lane-pad
    w_pw_g = jnp.transpose(w_pw.reshape(Cout, C, dm), (2, 1, 0))       # (dm, C, Cout)
    if Cp != Cout:
        w_pw_g = jnp.pad(w_pw_g, ((0, 0), (0, 0), (0, Cp - Cout)))
        b_pw_g = jnp.pad(b_pw, (0, Cp - Cout)).reshape(1, Cp)
    else:
        b_pw_g = b_pw.reshape(1, Cp)

    out = pl.pallas_call(
        functools.partial(_sepconv_kernel, dilation=dilation),
        out_shape=jax.ShapeDtypeStruct((N, OH, OWp, Cp), x.dtype),
        grid_spec=pltpu.PrefetchScalarGridSpec(
            num_scalar_prefetch=0,
            grid=(N, R),
            in_specs=[
                # input fetched once per batch element; reused across row tiles
                pl.BlockSpec((1, HPP, WPP, C), lambda n, r: (n, 0, 0, 0)),
                pl.BlockSpec((dm, KH, KW, C), lambda n, r: (0, 0, 0, 0)),
                pl.BlockSpec((dm, C), lambda n, r: (0, 0)),
                pl.BlockSpec((dm, C, Cp), lambda n, r: (0, 0, 0)),
                pl.BlockSpec((1, Cp), lambda n, r: (0, 0)),
            ],
            out_specs=pl.BlockSpec((1, tr, OWp, Cp), lambda n, r: (n, r, 0, 0)),
        ),
        compiler_params=pltpu.CompilerParams(
            dimension_semantics=("parallel", "parallel"),
            vmem_limit_bytes=64 * 1024 * 1024),
    )(x_nhwc, w_dw_g, b_dw_g, w_pw_g, b_pw_g)

    if Cp != Cout or OWp != OW:
        out = out[:, :, :OW, :Cout]
    return jnp.transpose(out, (0, 3, 1, 2))                      # back to NCHW


# -----------------------------------------------------------------------------
# Pure-JAX reference (matches the PyTorch module semantics).
# -----------------------------------------------------------------------------
def _reference_separable_conv2d(x, w_dw, b_dw, w_pw, b_pw, *, padding=0, dilation=1):
    C = x.shape[1]
    y = jax.lax.conv_general_dilated(
        x, w_dw, window_strides=(1, 1),
        padding=[(padding, padding), (padding, padding)],
        rhs_dilation=(dilation, dilation),
        dimension_numbers=('NCHW', 'OIHW', 'NCHW'),
        feature_group_count=C)
    y = y + b_dw.reshape(1, -1, 1, 1)
    z = jax.lax.conv_general_dilated(
        y, w_pw, window_strides=(1, 1), padding='VALID',
        dimension_numbers=('NCHW', 'OIHW', 'NCHW'))
    return z + b_pw.reshape(1, -1, 1, 1)


if __name__ == "__main__":
    key = jax.random.PRNGKey(0)
    k1, k2, k3, k4, k5 = jax.random.split(key, 5)

    N, C, H, W = 2, 4, 16, 16
    Cout, K = 8, 3

    x = jax.random.normal(k1, (N, C, H, W), dtype=jnp.float32)
    w_dw = jax.random.normal(k2, (C, 1, K, K), dtype=jnp.float32) * 0.2
    b_dw = jax.random.normal(k3, (C,), dtype=jnp.float32) * 0.1
    w_pw = jax.random.normal(k4, (Cout, C, 1, 1), dtype=jnp.float32) * 0.2
    b_pw = jax.random.normal(k5, (Cout,), dtype=jnp.float32) * 0.1

    out = separable_conv2d(x, w_dw, b_dw, w_pw, b_pw)
    out = jax.block_until_ready(out)

    ref = _reference_separable_conv2d(x, w_dw, b_dw, w_pw, b_pw)
    assert out.shape == ref.shape == (N, Cout, H - K + 1, W - K + 1)
    assert out.dtype == x.dtype
    max_err = float(jnp.max(jnp.abs(out - ref)))
    assert max_err < 5e-3, f"max abs error too large: {max_err}"

    print("KERNEL_OK")
</pallas_src>

<mosaic_0001>
module attributes {stable_mosaic.version = 11 : i64} {
  func.func @_sepconv_kernel(%arg0: i32, %arg1: i32, %arg2: memref<1x16x18x4xf32, #tpu.memory_space<vmem>>, %arg3: memref<1x3x3x4xf32, #tpu.memory_space<vmem>>, %arg4: memref<1x4xf32, #tpu.memory_space<vmem>>, %arg5: memref<1x4x128xf32, #tpu.memory_space<vmem>>, %arg6: memref<1x128xf32, #tpu.memory_space<vmem>>, %arg7: memref<1x14x16x128xf32, #tpu.memory_space<vmem>>) attributes {dimension_semantics = [#tpu.dimension_semantics<parallel>, #tpu.dimension_semantics<parallel>], iteration_bounds = array<i64: 2, 1>, scalar_prefetch = 0 : i64, scratch_operands = 0 : i64, tpu.core_type = #tpu.core_type<tc>, window_params = [{transform_indices = @transform_0, window_bounds = array<i64: 1, 16, 18, 4>}, {pipeline_mode = #tpu.pipeline_mode<synchronous>, transform_indices = @transform_1, window_bounds = array<i64: 1, 3, 3, 4>}, {pipeline_mode = #tpu.pipeline_mode<synchronous>, transform_indices = @transform_2, window_bounds = array<i64: 1, 4>}, {pipeline_mode = #tpu.pipeline_mode<synchronous>, transform_indices = @transform_3, window_bounds = array<i64: 1, 4, 128>}, {pipeline_mode = #tpu.pipeline_mode<synchronous>, transform_indices = @transform_4, window_bounds = array<i64: 1, 128>}, {transform_indices = @transform_5, window_bounds = array<i64: 1, 14, 16, 128>}]} {
    %c14_i32 = arith.constant 14 : i32
    %0 = arith.muli %arg1, %c14_i32 : i32
    %1 = tpu.assume_multiple %0, 14 : i32
    %cst = arith.constant 0.000000e+00 : f32
    %2 = vector.broadcast %cst : f32 to vector<224x128xf32>
    %c0 = arith.constant 0 : index
    %c0_0 = arith.constant 0 : index
    %c0_1 = arith.constant 0 : index
    %c0_2 = arith.constant 0 : index
    %3 = vector.load %arg3[%c0, %c0_0, %c0_1, %c0_2] : memref<1x3x3x4xf32, #tpu.memory_space<vmem>>, vector<1x3x3x4xf32>
    %4 = vector.shape_cast %3 : vector<1x3x3x4xf32> to vector<3x3x4xf32>
    %cst_3 = arith.constant 0.000000e+00 : f32
    %5 = vector.broadcast %cst_3 : f32 to vector<14x16x4xf32>
    %c0_i32 = arith.constant 0 : i32
    %6 = arith.addi %1, %c0_i32 : i32
    %c0_4 = arith.constant 0 : index
    %7 = arith.index_cast %6 : i32 to index
    %c0_5 = arith.constant 0 : index
    %c0_6 = arith.constant 0 : index
    %8 = vector.load %arg2[%c0_4, %7, %c0_5, %c0_6] : memref<1x16x18x4xf32, #tpu.memory_space<vmem>>, vector<1x14x16x4xf32>
    %9 = vector.shape_cast %8 : vector<1x14x16x4xf32> to vector<14x16x4xf32>
    %10 = vector.extract_strided_slice %4 {offsets = [0, 0, 0], sizes = [1, 1, 4], strides = [1, 1, 1]} : vector<3x3x4xf32> to vector<1x1x4xf32>
    %11 = vector.broadcast %10 : vector<1x1x4xf32> to vector<14x16x4xf32>
    %12 = arith.mulf %9, %11 : vector<14x16x4xf32>
    %13 = arith.addf %5, %12 : vector<14x16x4xf32>
    %c0_i32_7 = arith.constant 0 : i32
    %14 = arith.addi %1, %c0_i32_7 : i32
    %c0_8 = arith.constant 0 : index
    %15 = arith.index_cast %14 : i32 to index
    %c1 = arith.constant 1 : index
    %c0_9 = arith.constant 0 : index
    %16 = vector.load %arg2[%c0_8, %15, %c1, %c0_9] : memref<1x16x18x4xf32, #tpu.memory_space<vmem>>, vector<1x14x16x4xf32>
    %17 = vector.shape_cast %16 : vector<1x14x16x4xf32> to vector<14x16x4xf32>
    %18 = vector.extract_strided_slice %4 {offsets = [0, 1, 0], sizes = [1, 1, 4], strides = [1, 1, 1]} : vector<3x3x4xf32> to vector<1x1x4xf32>
    %19 = vector.broadcast %18 : vector<1x1x4xf32> to vector<14x16x4xf32>
    %20 = arith.mulf %17, %19 : vector<14x16x4xf32>
    %21 = arith.addf %13, %20 : vector<14x16x4xf32>
    %c0_i32_10 = arith.constant 0 : i32
    %22 = arith.addi %1, %c0_i32_10 : i32
    %c0_11 = arith.constant 0 : index
    %23 = arith.index_cast %22 : i32 to index
    %c2 = arith.constant 2 : index
    %c0_12 = arith.constant 0 : index
    %24 = vector.load %arg2[%c0_11, %23, %c2, %c0_12] : memref<1x16x18x4xf32, #tpu.memory_space<vmem>>, vector<1x14x16x4xf32>
    %25 = vector.shape_cast %24 : vector<1x14x16x4xf32> to vector<14x16x4xf32>
    %26 = vector.extract_strided_slice %4 {offsets = [0, 2, 0], sizes = [1, 1, 4], strides = [1, 1, 1]} : vector<3x3x4xf32> to vector<1x1x4xf32>
    %27 = vector.broadcast %26 : vector<1x1x4xf32> to vector<14x16x4xf32>
    %28 = arith.mulf %25, %27 : vector<14x16x4xf32>
    %29 = arith.addf %21, %28 : vector<14x16x4xf32>
    %c1_i32 = arith.constant 1 : i32
    %30 = arith.addi %1, %c1_i32 : i32
    %c0_13 = arith.constant 0 : index
    %31 = arith.index_cast %30 : i32 to index
    %c0_14 = arith.constant 0 : index
    %c0_15 = arith.constant 0 : index
    %32 = vector.load %arg2[%c0_13, %31, %c0_14, %c0_15] : memref<1x16x18x4xf32, #tpu.memory_space<vmem>>, vector<1x14x16x4xf32>
    %33 = vector.shape_cast %32 : vector<1x14x16x4xf32> to vector<14x16x4xf32>
    %34 = vector.extract_strided_slice %4 {offsets = [1, 0, 0], sizes = [1, 1, 4], strides = [1, 1, 1]} : vector<3x3x4xf32> to vector<1x1x4xf32>
    %35 = vector.broadcast %34 : vector<1x1x4xf32> to vector<14x16x4xf32>
    %36 = arith.mulf %33, %35 : vector<14x16x4xf32>
    %37 = arith.addf %29, %36 : vector<14x16x4xf32>
    %c1_i32_16 = arith.constant 1 : i32
    %38 = arith.addi %1, %c1_i32_16 : i32
    %c0_17 = arith.constant 0 : index
    %39 = arith.index_cast %38 : i32 to index
    %c1_18 = arith.constant 1 : index
    %c0_19 = arith.constant 0 : index
    %40 = vector.load %arg2[%c0_17, %39, %c1_18, %c0_19] : memref<1x16x18x4xf32, #tpu.memory_space<vmem>>, vector<1x14x16x4xf32>
    %41 = vector.shape_cast %40 : vector<1x14x16x4xf32> to vector<14x16x4xf32>
    %42 = vector.extract_strided_slice %4 {offsets = [1, 1, 0], sizes = [1, 1, 4], strides = [1, 1, 1]} : vector<3x3x4xf32> to vector<1x1x4xf32>
    %43 = vector.broadcast %42 : vector<1x1x4xf32> to vector<14x16x4xf32>
    %44 = arith.mulf %41, %43 : vector<14x16x4xf32>
    %45 = arith.addf %37, %44 : vector<14x16x4xf32>
    %c1_i32_20 = arith.constant 1 : i32
    %46 = arith.addi %1, %c1_i32_20 : i32
    %c0_21 = arith.constant 0 : index
    %47 = arith.index_cast %46 : i32 to index
    %c2_22 = arith.constant 2 : index
    %c0_23 = arith.constant 0 : index
    %48 = vector.load %arg2[%c0_21, %47, %c2_22, %c0_23] : memref<1x16x18x4xf32, #tpu.memory_space<vmem>>, vector<1x14x16x4xf32>
    %49 = vector.shape_cast %48 : vector<1x14x16x4xf32> to vector<14x16x4xf32>
    %50 = vector.extract_strided_slice %4 {offsets = [1, 2, 0], sizes = [1, 1, 4], strides = [1, 1, 1]} : vector<3x3x4xf32> to vector<1x1x4xf32>
    %51 = vector.broadcast %50 : vector<1x1x4xf32> to vector<14x16x4xf32>
    %52 = arith.mulf %49, %51 : vector<14x16x4xf32>
    %53 = arith.addf %45, %52 : vector<14x16x4xf32>
    %c2_i32 = arith.constant 2 : i32
    %54 = arith.addi %1, %c2_i32 : i32
    %c0_24 = arith.constant 0 : index
    %55 = arith.index_cast %54 : i32 to index
    %c0_25 = arith.constant 0 : index
    %c0_26 = arith.constant 0 : index
    %56 = vector.load %arg2[%c0_24, %55, %c0_25, %c0_26] : memref<1x16x18x4xf32, #tpu.memory_space<vmem>>, vector<1x14x16x4xf32>
    %57 = vector.shape_cast %56 : vector<1x14x16x4xf32> to vector<14x16x4xf32>
    %58 = vector.extract_strided_slice %4 {offsets = [2, 0, 0], sizes = [1, 1, 4], strides = [1, 1, 1]} : vector<3x3x4xf32> to vector<1x1x4xf32>
    %59 = vector.broadcast %58 : vector<1x1x4xf32> to vector<14x16x4xf32>
    %60 = arith.mulf %57, %59 : vector<14x16x4xf32>
    %61 = arith.addf %53, %60 : vector<14x16x4xf32>
    %c2_i32_27 = arith.constant 2 : i32
    %62 = arith.addi %1, %c2_i32_27 : i32
    %c0_28 = arith.constant 0 : index
    %63 = arith.index_cast %62 : i32 to index
    %c1_29 = arith.constant 1 : index
    %c0_30 = arith.constant 0 : index
    %64 = vector.load %arg2[%c0_28, %63, %c1_29, %c0_30] : memref<1x16x18x4xf32, #tpu.memory_space<vmem>>, vector<1x14x16x4xf32>
    %65 = vector.shape_cast %64 : vector<1x14x16x4xf32> to vector<14x16x4xf32>
    %66 = vector.extract_strided_slice %4 {offsets = [2, 1, 0], sizes = [1, 1, 4], strides = [1, 1, 1]} : vector<3x3x4xf32> to vector<1x1x4xf32>
    %67 = vector.broadcast %66 : vector<1x1x4xf32> to vector<14x16x4xf32>
    %68 = arith.mulf %65, %67 : vector<14x16x4xf32>
    %69 = arith.addf %61, %68 : vector<14x16x4xf32>
    %c2_i32_31 = arith.constant 2 : i32
    %70 = arith.addi %1, %c2_i32_31 : i32
    %c0_32 = arith.constant 0 : index
    %71 = arith.index_cast %70 : i32 to index
    %c2_33 = arith.constant 2 : index
    %c0_34 = arith.constant 0 : index
    %72 = vector.load %arg2[%c0_32, %71, %c2_33, %c0_34] : memref<1x16x18x4xf32, #tpu.memory_space<vmem>>, vector<1x14x16x4xf32>
    %73 = vector.shape_cast %72 : vector<1x14x16x4xf32> to vector<14x16x4xf32>
    %74 = vector.extract_strided_slice %4 {offsets = [2, 2, 0], sizes = [1, 1, 4], strides = [1, 1, 1]} : vector<3x3x4xf32> to vector<1x1x4xf32>
    %75 = vector.broadcast %74 : vector<1x1x4xf32> to vector<14x16x4xf32>
    %76 = arith.mulf %73, %75 : vector<14x16x4xf32>
    %77 = arith.addf %69, %76 : vector<14x16x4xf32>
    %c0_35 = arith.constant 0 : index
    %c0_36 = arith.constant 0 : index
    %78 = vector.load %arg4[%c0_35, %c0_36] : memref<1x4xf32, #tpu.memory_space<vmem>>, vector<1x4xf32>
    %79 = vector.shape_cast %78 : vector<1x4xf32> to vector<1x1x4xf32>
    %80 = vector.broadcast %79 : vector<1x1x4xf32> to vector<14x16x4xf32>
    %81 = arith.addf %77, %80 : vector<14x16x4xf32>
    %82 = vector.shape_cast %81 : vector<14x16x4xf32> to vector<224x4xf32>
    %c0_37 = arith.constant 0 : index
    %c0_38 = arith.constant 0 : index
    %c0_39 = arith.constant 0 : index
    %83 = vector.load %arg5[%c0_37, %c0_38, %c0_39] : memref<1x4x128xf32, #tpu.memory_space<vmem>>, vector<1x4x128xf32>
    %84 = vector.shape_cast %83 : vector<1x4x128xf32> to vector<4x128xf32>
    %cst_40 = arith.constant dense<0.000000e+00> : vector<224x128xf32>
    %85 = tpu.matmul %82, %84, %cst_40 {dimension_numbers = #tpu.dot_dimension_numbers<[1], [0], [0], [1], [0, 0, 1, 1], [], []>} : vector<224x4xf32>, vector<4x128xf32>, vector<224x128xf32> -> vector<224x128xf32>
    %86 = arith.addf %2, %85 : vector<224x128xf32>
    %c0_41 = arith.constant 0 : index
    %c0_42 = arith.constant 0 : index
    %87 = vector.load %arg6[%c0_41, %c0_42] : memref<1x128xf32, #tpu.memory_space<vmem>>, vector<1x128xf32>
    %88 = vector.broadcast %87 : vector<1x128xf32> to vector<224x128xf32>
    %89 = arith.addf %86, %88 : vector<224x128xf32>
    %90 = vector.shape_cast %89 : vector<224x128xf32> to vector<14x16x128xf32>
    %c0_43 = arith.constant 0 : index
    %c0_44 = arith.constant 0 : index
    %c0_45 = arith.constant 0 : index
    %c0_46 = arith.constant 0 : index
    %91 = vector.load %arg7[%c0_43, %c0_44, %c0_45, %c0_46] : memref<1x14x16x128xf32, #tpu.memory_space<vmem>>, vector<1x14x16x128xf32>
    %92 = vector.shape_cast %91 : vector<1x14x16x128xf32> to vector<14x16x128xf32>
    %93 = vector.shape_cast %90 : vector<14x16x128xf32> to vector<1x14x16x128xf32>
    tpu.vector_store %arg7[%c0_43, %c0_44, %c0_45, %c0_46], %93 {strides = array<i32>} : memref<1x14x16x128xf32, #tpu.memory_space<vmem>>, vector<1x14x16x128xf32>,
    return
  }
  func.func @transform_0(%arg0: i32, %arg1: i32) -> (i32, i32, i32, i32) {
    %c0_i32 = arith.constant 0 : i32
    %c0_i32_0 = arith.constant 0 : i32
    %c0_i32_1 = arith.constant 0 : i32
    %c0_i32_2 = arith.constant 0 : i32
    return %arg0, %c0_i32, %c0_i32_0, %c0_i32_1 : i32, i32, i32, i32
  }
  func.func @transform_1(%arg0: i32, %arg1: i32) -> (i32, i32, i32, i32) {
    %c0_i32 = arith.constant 0 : i32
    %c0_i32_0 = arith.constant 0 : i32
    %c0_i32_1 = arith.constant 0 : i32
    %c0_i32_2 = arith.constant 0 : i32
    %c0_i32_3 = arith.constant 0 : i32
    return %c0_i32, %c0_i32_0, %c0_i32_1, %c0_i32_2 : i32, i32, i32, i32
  }
  func.func @transform_2(%arg0: i32, %arg1: i32) -> (i32, i32) {
    %c0_i32 = arith.constant 0 : i32
    %c0_i32_0 = arith.constant 0 : i32
    %c0_i32_1 = arith.constant 0 : i32
    return %c0_i32, %c0_i32_0 : i32, i32
  }
  func.func @transform_3(%arg0: i32, %arg1: i32) -> (i32, i32, i32) {
    %c0_i32 = arith.constant 0 : i32
    %c0_i32_0 = arith.constant 0 : i32
    %c0_i32_1 = arith.constant 0 : i32
    %c0_i32_2 = arith.constant 0 : i32
    return %c0_i32, %c0_i32_0, %c0_i32_1 : i32, i32, i32
  }
  func.func @transform_4(%arg0: i32, %arg1: i32) -> (i32, i32) {
    %c0_i32 = arith.constant 0 : i32
    %c0_i32_0 = arith.constant 0 : i32
    %c0_i32_1 = arith.constant 0 : i32
    return %c0_i32, %c0_i32_0 : i32, i32
  }
  func.func @transform_5(%arg0: i32, %arg1: i32) -> (i32, i32, i32, i32) {
    %c0_i32 = arith.constant 0 : i32
    %c0_i32_0 = arith.constant 0 : i32
    %c0_i32_1 = arith.constant 0 : i32
    return %arg0, %arg1, %c0_i32, %c0_i32_0 : i32, i32, i32, i32
  }
}

</mosaic_0001>

<llo_original>
// kernel: tpu_custom_call.1
$region0: #{tpu_custom_call.1}
  #allocation0 [shape = 'u32[]', space=smem, size = 0x4, offset = 0x4, fixed_abs, tag = 'smem constant byte address 0x4 - core index']
  #allocation1 [shape = 'u32[72,128]{1,0:T(1,128)}', space=vmem, size = 0x9000, scoped, tag = 'internal scratch']
  %s0 = inlined_call_operand.vmem [shape: f32[2,16,18,4], index: 0, kind: input, shape index: {}]
  %s1 = inlined_call_operand.vmem [shape: f32[1,3,3,4], index: 1, kind: input, shape index: {}]
  %s2 = inlined_call_operand.vmem [shape: f32[1,4], index: 2, kind: input, shape index: {}]
  %s3 = inlined_call_operand.vmem [shape: f32[1,4,128], index: 3, kind: input, shape index: {}]
  %s4 = inlined_call_operand.vmem [shape: f32[1,128], index: 4, kind: input, shape index: {}]
  %s5 = inlined_call_operand.hbm [shape: f32[2,14,16,128], index: 5, kind: output, shape index: {}]
  %s6 = sld [smem:[#allocation0]]
  $region53: #{tpu_custom_call.1} parent=0
    _
  %s8 = ssub.s32 1, %s6
  %s9 = scalar_select 0, %s8, %s6
  $region1: #{tpu_custom_call.1} parent=0
    #allocation2 [shape = 'u8[229376]{0}', space=vmem, size = 0x38000, scoped, tag = 'output window, operand 0']
    #allocation3 [shape = 's32[2]{0}', space=sflag, size = 0x8, scoped, tag = 'scoped memory for tpu_custom_call.1']
    %10 = vsyncpa [#allocation3], 0
    %s11 = scalar_lea.sflag [#allocation3], 1
    %12 = vsyncpa %s11, 0
    loop: start=0, step=1, limit=4
    $region2: #{tpu_custom_call.1} parent=1 // loop_pre_header
      _
    $region3: #{tpu_custom_call.1} parent=1 // loop_header
      %s14 = sphi 0, %s18
      %p15 = scmp.ge.s32.totalorder %s14, 4
      %s21 = sphi 0, %s33
      %s22 = sphi 0, %s29
      %s23 = sphi 0, %s21
      %s24 = sphi 0, %s22
      %s25 = sphi 0, %s23
      %s26 = sphi 0, %s24
      %s36 = sphi 0, %s38
      %s39 = sphi 0, %s36
      %s40 = sphi 0, %s39
      %s56 = sphi 0, %s40
      %s60 = sphi 0, %s60
      %s62 = sphi 0, %s60
      %s63 = sphi 0, %s62
      %s77 = sphi 0, %s63
      %s81 = sphi 0, %s81
      %s83 = sphi 0, %s81
      %s84 = sphi 0, %s83
      %s98 = sphi 0, %s84
      %s102 = sphi 0, %s102
      %s104 = sphi 0, %s102
      %s105 = sphi 0, %s104
      %s119 = sphi 0, %s105
      %s123 = sphi 0, %s123
      %s125 = sphi 0, %s123
      %s126 = sphi 0, %s125
      %s140 = sphi 0, %s126
      %s148 = sphi 0, %s150
      %s151 = sphi 0, %s148
      %s152 = sphi 0, %s151
      %s168 = sphi 0, %s152
    $region4: #{tpu_custom_call.1} parent=1 // loop_header_branch
      %17 = sbr.rel (%p15) target = $region8
    $region5: #{tpu_custom_call.1} parent=1 // loop_body
      %s19 = ssub.s32 %s14, 1
      %s20 = ssub.s32 %s14, 2
      %s27 = sadd.s32 1, %s22
      %p28 = scmp.ge.s32.totalorder %s27, 1
      %s29 = scalar_select %p28, 0, %s27
      %s30 = sadd.s32 1, %s21
      %s31 = scalar_select %p28, %s30, %s21
      %p32 = scmp.ge.s32.totalorder %s31, 2
      %s33 = scalar_select %p32, 0, %s31
      %s34 = ssub.s32 %s21, %s33
      %p35 = scmp.eq.s32.totalorder %s34, 0
      %s37 = sadd.s32 %s36, 1
      %s38 = scalar_select %p35, %s36, %s37
      %p41 = pneg %p35
      %p42 = scmp.eq.s32.totalorder %s14, 1
      %p43 = por %p41, %p42
      %p44 = scmp.ne.s32.totalorder %s36, %s39
      %p45 = scmp.eq.s32.totalorder %s14, 0
      %p46 = por %p44, %p45
      %p47 = scmp.ne.s32.totalorder %s36, %s39
      %p48 = scmp.eq.s32.totalorder %s19, 1
      %p49 = por %p47, %p48
      %p50 = scmp.ne.s32.totalorder %s39, %s40
      %p51 = scmp.eq.s32.totalorder %s19, 0
      %p52 = por %p50, %p51
      %p53 = scmp.ne.s32.totalorder %s39, %s40
      %p54 = scmp.eq.s32.totalorder %s20, 1
      %p55 = por %p53, %p54
      %p57 = scmp.ne.s32.totalorder %s40, %s56
      %p58 = scmp.eq.s32.totalorder %s20, 0
      %p59 = por %p57, %p58
      %s61 = sadd.s32 %s60, 1
      %p64 = scmp.eq.s32.totalorder %s14, 1
      %p65 = scmp.ne.s32.totalorder %s60, %s62
      %p66 = scmp.eq.s32.totalorder %s14, 0
      %p67 = por %p65, %p66
      %p68 = scmp.ne.s32.totalorder %s60, %s62
      %p69 = scmp.eq.s32.totalorder %s19, 1
      %p70 = por %p68, %p69
      %p71 = scmp.ne.s32.totalorder %s62, %s63
      %p72 = scmp.eq.s32.totalorder %s19, 0
      %p73 = por %p71, %p72
      %p74 = scmp.ne.s32.totalorder %s62, %s63
      %p75 = scmp.eq.s32.totalorder %s20, 1
      %p76 = por %p74, %p75
      %p78 = scmp.ne.s32.totalorder %s63, %s77
      %p79 = scmp.eq.s32.totalorder %s20, 0
      %p80 = por %p78, %p79
      %s82 = sadd.s32 %s81, 1
      %p85 = scmp.eq.s32.totalorder %s14, 1
      %p86 = scmp.ne.s32.totalorder %s81, %s83
      %p87 = scmp.eq.s32.totalorder %s14, 0
      %p88 = por %p86, %p87
      %p89 = scmp.ne.s32.totalorder %s81, %s83
      %p90 = scmp.eq.s32.totalorder %s19, 1
      %p91 = por %p89, %p90
      %p92 = scmp.ne.s32.totalorder %s83, %s84
      %p93 = scmp.eq.s32.totalorder %s19, 0
      %p94 = por %p92, %p93
      %p95 = scmp.ne.s32.totalorder %s83, %s84
      %p96 = scmp.eq.s32.totalorder %s20, 1
      %p97 = por %p95, %p96
      %p99 = scmp.ne.s32.totalorder %s84, %s98
      %p100 = scmp.eq.s32.totalorder %s20, 0
      %p101 = por %p99, %p100
      %s103 = sadd.s32 %s102, 1
      %p106 = scmp.eq.s32.totalorder %s14, 1
      %p107 = scmp.ne.s32.totalorder %s102, %s104
      %p108 = scmp.eq.s32.totalorder %s14, 0
      %p109 = por %p107, %p108
      %p110 = scmp.ne.s32.totalorder %s102, %s104
      %p111 = scmp.eq.s32.totalorder %s19, 1
      %p112 = por %p110, %p111
      %p113 = scmp.ne.s32.totalorder %s104, %s105
      %p114 = scmp.eq.s32.totalorder %s19, 0
      %p115 = por %p113, %p114
      %p116 = scmp.ne.s32.totalorder %s104, %s105
      %p117 = scmp.eq.s32.totalorder %s20, 1
      %p118 = por %p116, %p117
      %p120 = scmp.ne.s32.totalorder %s105, %s119
      %p121 = scmp.eq.s32.totalorder %s20, 0
      %p122 = por %p120, %p121
      %s124 = sadd.s32 %s123, 1
      %p127 = scmp.eq.s32.totalorder %s14, 1
      %p128 = scmp.ne.s32.totalorder %s123, %s125
      %p129 = scmp.eq.s32.totalorder %s14, 0
      %p130 = por %p128, %p129
      %p131 = scmp.ne.s32.totalorder %s123, %s125
      %p132 = scmp.eq.s32.totalorder %s19, 1
      %p133 = por %p131, %p132
      %p134 = scmp.ne.s32.totalorder %s125, %s126
      %p135 = scmp.eq.s32.totalorder %s19, 0
      %p136 = por %p134, %p135
      %p137 = scmp.ne.s32.totalorder %s125, %s126
      %p138 = scmp.eq.s32.totalorder %s20, 1
      %p139 = por %p137, %p138
      %p141 = scmp.ne.s32.totalorder %s126, %s140
      %p142 = scmp.eq.s32.totalorder %s20, 0
      %p143 = por %p141, %p142
      %s144 = ssub.s32 %s21, %s33
      %s145 = ssub.s32 %s22, %s29
      %s146 = sor.u32 %s144, %s145
      %p147 = scmp.eq.s32.totalorder %s146, 0
      %s149 = sadd.s32 %s148, 1
      %s150 = scalar_select %p147, %s148, %s149
      %p153 = pneg %p147
      %p154 = scmp.eq.s32.totalorder %s14, 1
      %p155 = por %p153, %p154
      %p156 = scmp.ne.s32.totalorder %s148, %s151
      %p157 = scmp.eq.s32.totalorder %s14, 0
      %p158 = por %p156, %p157
      %p159 = scmp.ne.s32.totalorder %s148, %s151
      %p160 = scmp.eq.s32.totalorder %s19, 1
      %p161 = por %p159, %p160
      %p162 = scmp.ne.s32.totalorder %s151, %s152
      %p163 = scmp.eq.s32.totalorder %s19, 0
      %p164 = por %p162, %p163
      %p165 = scmp.ne.s32.totalorder %s151, %s152
      %p166 = scmp.eq.s32.totalorder %s20, 1
      %p167 = por %p165, %p166
      %p169 = scmp.ne.s32.totalorder %s152, %s168
      %p170 = scmp.eq.s32.totalorder %s20, 0
      %p171 = por %p169, %p170
      %p172 = scmp.le.s32.totalorder 1, %s14
      %p173 = scmp.lt.s32.totalorder %s14, 3
      %p174 = pnand %p172, %p173
      %p175 = pneg %p174
      // Predicated region
      $region9: #{tpu_custom_call.1} parent=5 // pred_check
        _
      $region10: #{tpu_custom_call.1} parent=5 // pred_check_branch
        %177 = sbr.rel (%p174) target = $region12
      $region11: #{tpu_custom_call.1} parent=5 // pred_region
        %s178 = ssub.s32 %s14, 1
        // Predicated region
        $region13: #{tpu_custom_call.1} parent=11 // pred_check
          %p179 = pneg %p73
        $region14: #{tpu_custom_call.1} parent=11 // pred_check_branch
          %181 = sbr.rel (%p179) target = $region16
        $region15: #{tpu_custom_call.1} parent=11 // pred_region
          _
        $region16: #{tpu_custom_call.1} parent=11 // pred_fallthru
          _
        // Predicated region
        $region17: #{tpu_custom_call.1} parent=11 // pred_check
          %p182 = pneg %p94
        $region18: #{tpu_custom_call.1} parent=11 // pred_check_branch
          %184 = sbr.rel (%p182) target = $region20
        $region19: #{tpu_custom_call.1} parent=11 // pred_region
          _
        $region20: #{tpu_custom_call.1} parent=11 // pred_fallthru
          _
        // Predicated region
        $region21: #{tpu_custom_call.1} parent=11 // pred_check
          %p185 = pneg %p115
        $region22: #{tpu_custom_call.1} parent=11 // pred_check_branch
          %187 = sbr.rel (%p185) target = $region24
        $region23: #{tpu_custom_call.1} parent=11 // pred_region
          _
        $region24: #{tpu_custom_call.1} parent=11 // pred_fallthru
          _
        // Predicated region
        $region25: #{tpu_custom_call.1} parent=11 // pred_check
          %p188 = pneg %p136
        $region26: #{tpu_custom_call.1} parent=11 // pred_check_branch
          %190 = sbr.rel (%p188) target = $region28
        $region27: #{tpu_custom_call.1} parent=11 // pred_region
          _
        $region28: #{tpu_custom_call.1} parent=11 // pred_fallthru
          _
      $region12: #{tpu_custom_call.1} parent=5 // pred_fallthru
        _
      %p191 = scmp.lt.s32.totalorder %s14, 2
      // Predicated region
      $region29: #{tpu_custom_call.1} parent=5 // pred_check
        %p192 = pneg %p191
      $region30: #{tpu_custom_call.1} parent=5 // pred_check_branch
        %194 = sbr.rel (%p192) target = $region32
      $region31: #{tpu_custom_call.1} parent=5 // pred_region
        // Predicated region
        $region33: #{tpu_custom_call.1} parent=31 // pred_check
          %p195 = pneg %p46
        $region34: #{tpu_custom_call.1} parent=31 // pred_check_branch
          %197 = sbr.rel (%p195) target = $region36
        $region35: #{tpu_custom_call.1} parent=31 // pred_region
          %p198 = scmp.lt.s32.totalorder %s21, 1
          %s199 = scalar_select %p198, %s21, 1
          %s200 = smul.addr %s199, 48
          %s201 = smul.addr %s200, 8
          %s202 = scalar_lea.vmem %s0, %s201
        $region36: #{tpu_custom_call.1} parent=31 // pred_fallthru
          _
      $region32: #{tpu_custom_call.1} parent=5 // pred_fallthru
        _
      %p203 = scmp.le.s32.totalorder 1, %s14
      %p204 = scmp.lt.s32.totalorder %s14, 3
      %p205 = pnand %p203, %p204
      %p206 = pneg %p205
      // Predicated region
      $region37: #{tpu_custom_call.1} parent=5 // pred_check
        _
      $region38: #{tpu_custom_call.1} parent=5 // pred_check_branch
        %208 = sbr.rel (%p205) target = $region40
      $region39: #{tpu_custom_call.1} parent=5 // pred_region
        %s209 = ssub.s32 %s14, 1
        %p210 = scmp.lt.s32.totalorder %s23, 1
        %s211 = scalar_select %p210, %s23, 1
        %s212 = smul.addr %s211, 48
        %s213 = smul.addr %s212, 8
        %s214 = scalar_lea.vmem %s0, %s213
        %p215 = pneg %p52
        %p216 = pneg %p49
        %p217 = pneg %p73
        %p218 = pneg %p70
        %p219 = pneg %p94
        %p220 = pneg %p91
        %p221 = pneg %p115
        %p222 = pneg %p112
        %p223 = pneg %p136
        %p224 = pneg %p133
        %p225 = pneg %p164
        %p226 = pneg %p161
        %s227 = sand.u32 %s151, 1
        %s228 = scalar_lea.sflag [#allocation3], %s227
        %s229 = sand.u32 %s151, 1
        %s230 = smul.addr %s229, 224
        %s231 = scalar_lea.vmem [#allocation2], %s230
        %p232 = scmp.lt.s32.totalorder %s23, 1
        %s233 = scalar_select %p232, %s23, 1
        %s234 = smul.addr %s233, 48
        %s235 = smul.addr %s234, 8
        %s236 = scalar_lea.vmem %s0, %s235
        %s237 = smul.u32 14, %s24
        %s238 = smul.u32 %s24, 14
        %v239 = vld [vmem:[%s1] sm:$0x7]
        %v240 = vld [vmem:[%s1 + $0x4] sm:$0x7]
        %v241 = vld [vmem:[%s1 + $0x8] sm:$0x7]
        %s242 = smul.u32 %s238, 24
        %s243 = scalar_lea.vmem %s236, %s242
        %v244 = vld [vmem:[%s243] sm:$0xff]
        %v245 = vld [vmem:[%s243 + $0x8] sm:$0xff]
        %v246 = vld [vmem:[%s243 + $0x18] sm:$0xff]
        %v247 = vld [vmem:[%s243 + $0x20] sm:$0xff]
        %v248 = vld [vmem:[%s243 + $0x30] sm:$0xff]
        %v249 = vld [vmem:[%s243 + $0x38] sm:$0xff]
        %v250 = vld [vmem:[%s243 + $0x48] sm:$0xff]
        %v251 = vld [vmem:[%s243 + $0x50] sm:$0xff]
        %v252 = vld [vmem:[%s243 + $0x60] sm:$0xff]
        %v253 = vld [vmem:[%s243 + $0x68] sm:$0xff]
        %v254 = vld [vmem:[%s243 + $0x78] sm:$0xff]
        %v255 = vld [vmem:[%s243 + $0x80] sm:$0xff]
        %v256 = vld [vmem:[%s243 + $0x90] sm:$0xff]
        %v257 = vld [vmem:[%s243 + $0x98] sm:$0xff]
        %v258 = vld [vmem:[%s243 + $0xa8] sm:$0xff]
        %v259 = vld [vmem:[%s243 + $0xb0] sm:$0xff]
        %v260 = vld [vmem:[%s243 + $0xc0] sm:$0xff]
        %v261 = vld [vmem:[%s243 + $0xc8] sm:$0xff]
        %v262 = vld [vmem:[%s243 + $0xd8] sm:$0xff]
        %v263 = vld [vmem:[%s243 + $0xe0] sm:$0xff]
        %v264 = vld [vmem:[%s243 + $0xf0] sm:$0xff]
        %v265 = vld [vmem:[%s243 + $0xf8] sm:$0xff]
        %v266 = vld [vmem:[%s243 + $0x108] sm:$0xff]
        %v267 = vld [vmem:[%s243 + $0x110] sm:$0xff]
        %v268 = vld [vmem:[%s243 + $0x120] sm:$0xff]
        %v269 = vld [vmem:[%s243 + $0x128] sm:$0xff]
        %v270 = vld [vmem:[%s243 + $0x138] sm:$0xff]
        %v271 = vld [vmem:[%s243 + $0x140] sm:$0xff]
        %v272 = vperm.slane %v239, 0
        %v273 = vmul.f32 %v244, %v272
        %v274 = vmul.f32 %v245, %v272
        %v275 = vmul.f32 %v246, %v272
        %v276 = vmul.f32 %v247, %v272
        %v277 = vmul.f32 %v248, %v272
        %v278 = vmul.f32 %v249, %v272
        %v279 = vmul.f32 %v250, %v272
        %v280 = vmul.f32 %v251, %v272
        %v281 = vmul.f32 %v252, %v272
        %v282 = vmul.f32 %v253, %v272
        %v283 = vmul.f32 %v254, %v272
        %v284 = vmul.f32 %v255, %v272
        %v285 = vmul.f32 %v256, %v272
        %v286 = vmul.f32 %v257, %v272
        %v287 = vmul.f32 %v258, %v272
        %v288 = vmul.f32 %v259, %v272
        %v289 = vmul.f32 %v260, %v272
        %v290 = vmul.f32 %v261, %v272
        %v291 = vmul.f32 %v262, %v272
        %v292 = vmul.f32 %v263, %v272
        %v293 = vmul.f32 %v264, %v272
        %v294 = vmul.f32 %v265, %v272
        %v295 = vmul.f32 %v266, %v272
        %v296 = vmul.f32 %v267, %v272
        %v297 = vmul.f32 %v268, %v272
        %v298 = vmul.f32 %v269, %v272
        %v299 = vmul.f32 %v270, %v272
        %v300 = vmul.f32 %v271, %v272
        %v301 = vadd.f32 %v273, 0.0
        %v302 = vadd.f32 %v274, 0.0
        %v303 = vadd.f32 %v275, 0.0
        %v304 = vadd.f32 %v276, 0.0
        %v305 = vadd.f32 %v277, 0.0
        %v306 = vadd.f32 %v278, 0.0
        %v307 = vadd.f32 %v279, 0.0
        %v308 = vadd.f32 %v280, 0.0
        %v309 = vadd.f32 %v281, 0.0
        %v310 = vadd.f32 %v282, 0.0
        %v311 = vadd.f32 %v283, 0.0
        %v312 = vadd.f32 %v284, 0.0
        %v313 = vadd.f32 %v285, 0.0
        %v314 = vadd.f32 %v286, 0.0
        %v315 = vadd.f32 %v287, 0.0
        %v316 = vadd.f32 %v288, 0.0
        %v317 = vadd.f32 %v289, 0.0
        %v318 = vadd.f32 %v290, 0.0
        %v319 = vadd.f32 %v291, 0.0
        %v320 = vadd.f32 %v292, 0.0
        %v321 = vadd.f32 %v293, 0.0
        %v322 = vadd.f32 %v294, 0.0
        %v323 = vadd.f32 %v295, 0.0
        %v324 = vadd.f32 %v296, 0.0
        %v325 = vadd.f32 %v297, 0.0
        %v326 = vadd.f32 %v298, 0.0
        %v327 = vadd.f32 %v299, 0.0
        %v328 = vadd.f32 %v300, 0.0
        %v329 = vld [vmem:[%s243 + $0x1] sm:$0xff]
        %v330 = vld [vmem:[%s243 + $0x9] sm:$0xff]
        %v331 = vld [vmem:[%s243 + $0x19] sm:$0xff]
        %v332 = vld [vmem:[%s243 + $0x21] sm:$0xff]
        %v333 = vld [vmem:[%s243 + $0x31] sm:$0xff]
        %v334 = vld [vmem:[%s243 + $0x39] sm:$0xff]
        %v335 = vld [vmem:[%s243 + $0x49] sm:$0xff]
        %v336 = vld [vmem:[%s243 + $0x51] sm:$0xff]
        %v337 = vld [vmem:[%s243 + $0x61] sm:$0xff]
        %v338 = vld [vmem:[%s243 + $0x69] sm:$0xff]
        %v339 = vld [vmem:[%s243 + $0x79] sm:$0xff]
        %v340 = vld [vmem:[%s243 + $0x81] sm:$0xff]
        %v341 = vld [vmem:[%s243 + $0x91] sm:$0xff]
        %v342 = vld [vmem:[%s243 + $0x99] sm:$0xff]
        %v343 = vld [vmem:[%s243 + $0xa9] sm:$0xff]
        %v344 = vld [vmem:[%s243 + $0xb1] sm:$0xff]
        %v345 = vld [vmem:[%s243 + $0xc1] sm:$0xff]
        %v346 = vld [vmem:[%s243 + $0xc9] sm:$0xff]
        %v347 = vld [vmem:[%s243 + $0xd9] sm:$0xff]
        %v348 = vld [vmem:[%s243 + $0xe1] sm:$0xff]
        %v349 = vld [vmem:[%s243 + $0xf1] sm:$0xff]
        %v350 = vld [vmem:[%s243 + $0xf9] sm:$0xff]
        %v351 = vld [vmem:[%s243 + $0x109] sm:$0xff]
        %v352 = vld [vmem:[%s243 + $0x111] sm:$0xff]
        %v353 = vld [vmem:[%s243 + $0x121] sm:$0xff]
        %v354 = vld [vmem:[%s243 + $0x129] sm:$0xff]
        %v355 = vld [vmem:[%s243 + $0x139] sm:$0xff]
        %v356 = vld [vmem:[%s243 + $0x141] sm:$0xff]
        %v357 = vperm.slane %v239, 1
        %v358 = vmul.f32 %v329, %v357
        %v359 = vmul.f32 %v330, %v357
        %v360 = vmul.f32 %v331, %v357
        %v361 = vmul.f32 %v332, %v357
        %v362 = vmul.f32 %v333, %v357
        %v363 = vmul.f32 %v334, %v357
        %v364 = vmul.f32 %v335, %v357
        %v365 = vmul.f32 %v336, %v357
        %v366 = vmul.f32 %v337, %v357
        %v367 = vmul.f32 %v338, %v357
        %v368 = vmul.f32 %v339, %v357
        %v369 = vmul.f32 %v340, %v357
        %v370 = vmul.f32 %v341, %v357
        %v371 = vmul.f32 %v342, %v357
        %v372 = vmul.f32 %v343, %v357
        %v373 = vmul.f32 %v344, %v357
        %v374 = vmul.f32 %v345, %v357
        %v375 = vmul.f32 %v346, %v357
        %v376 = vmul.f32 %v347, %v357
        %v377 = vmul.f32 %v348, %v357
        %v378 = vmul.f32 %v349, %v357
        %v379 = vmul.f32 %v350, %v357
        %v380 = vmul.f32 %v351, %v357
        %v381 = vmul.f32 %v352, %v357
        %v382 = vmul.f32 %v353, %v357
        %v383 = vmul.f32 %v354, %v357
        %v384 = vmul.f32 %v355, %v357
        %v385 = vmul.f32 %v356, %v357
        %v386 = vadd.f32 %v301, %v358
        %v387 = vadd.f32 %v302, %v359
        %v388 = vadd.f32 %v303, %v360
        %v389 = vadd.f32 %v304, %v361
        %v390 = vadd.f32 %v305, %v362
        %v391 = vadd.f32 %v306, %v363
        %v392 = vadd.f32 %v307, %v364
        %v393 = vadd.f32 %v308, %v365
        %v394 = vadd.f32 %v309, %v366
        %v395 = vadd.f32 %v310, %v367
        %v396 = vadd.f32 %v311, %v368
        %v397 = vadd.f32 %v312, %v369
        %v398 = vadd.f32 %v313, %v370
        %v399 = vadd.f32 %v314, %v371
        %v400 = vadd.f32 %v315, %v372
        %v401 = vadd.f32 %v316, %v373
        %v402 = vadd.f32 %v317, %v374
        %v403 = vadd.f32 %v318, %v375
        %v404 = vadd.f32 %v319, %v376
        %v405 = vadd.f32 %v320, %v377
        %v406 = vadd.f32 %v321, %v378
        %v407 = vadd.f32 %v322, %v379
        %v408 = vadd.f32 %v323, %v380
        %v409 = vadd.f32 %v324, %v381
        %v410 = vadd.f32 %v325, %v382
        %v411 = vadd.f32 %v326, %v383
        %v412 = vadd.f32 %v327, %v384
        %v413 = vadd.f32 %v328, %v385
        %v414 = vld [vmem:[%s243 + $0x2] sm:$0xff]
        %v415 = vld [vmem:[%s243 + $0xa] sm:$0xff]
        %v416 = vld [vmem:[%s243 + $0x1a] sm:$0xff]
        %v417 = vld [vmem:[%s243 + $0x22] sm:$0xff]
        %v418 = vld [vmem:[%s243 + $0x32] sm:$0xff]
        %v419 = vld [vmem:[%s243 + $0x3a] sm:$0xff]
        %v420 = vld [vmem:[%s243 + $0x4a] sm:$0xff]
        %v421 = vld [vmem:[%s243 + $0x52] sm:$0xff]
        %v422 = vld [vmem:[%s243 + $0x62] sm:$0xff]
        %v423 = vld [vmem:[%s243 + $0x6a] sm:$0xff]
        %v424 = vld [vmem:[%s243 + $0x7a] sm:$0xff]
        %v425 = vld [vmem:[%s243 + $0x82] sm:$0xff]
        %v426 = vld [vmem:[%s243 + $0x92] sm:$0xff]
        %v427 = vld [vmem:[%s243 + $0x9a] sm:$0xff]
        %v428 = vld [vmem:[%s243 + $0xaa] sm:$0xff]
        %v429 = vld [vmem:[%s243 + $0xb2] sm:$0xff]
        %v430 = vld [vmem:[%s243 + $0xc2] sm:$0xff]
        %v431 = vld [vmem:[%s243 + $0xca] sm:$0xff]
        %v432 = vld [vmem:[%s243 + $0xda] sm:$0xff]
        %v433 = vld [vmem:[%s243 + $0xe2] sm:$0xff]
        %v434 = vld [vmem:[%s243 + $0xf2] sm:$0xff]
        %v435 = vld [vmem:[%s243 + $0xfa] sm:$0xff]
        %v436 = vld [vmem:[%s243 + $0x10a] sm:$0xff]
        %v437 = vld [vmem:[%s243 + $0x112] sm:$0xff]
        %v438 = vld [vmem:[%s243 + $0x122] sm:$0xff]
        %v439 = vld [vmem:[%s243 + $0x12a] sm:$0xff]
        %v440 = vld [vmem:[%s243 + $0x13a] sm:$0xff]
        %v441 = vld [vmem:[%s243 + $0x142] sm:$0xff]
        %v442 = vperm.slane %v239, 2
        %v443 = vmul.f32 %v414, %v442
        %v444 = vmul.f32 %v415, %v442
        %v445 = vmul.f32 %v416, %v442
        %v446 = vmul.f32 %v417, %v442
        %v447 = vmul.f32 %v418, %v442
        %v448 = vmul.f32 %v419, %v442
        %v449 = vmul.f32 %v420, %v442
        %v450 = vmul.f32 %v421, %v442
        %v451 = vmul.f32 %v422, %v442
        %v452 = vmul.f32 %v423, %v442
        %v453 = vmul.f32 %v424, %v442
        %v454 = vmul.f32 %v425, %v442
        %v455 = vmul.f32 %v426, %v442
        %v456 = vmul.f32 %v427, %v442
        %v457 = vmul.f32 %v428, %v442
        %v458 = vmul.f32 %v429, %v442
        %v459 = vmul.f32 %v430, %v442
        %v460 = vmul.f32 %v431, %v442
        %v461 = vmul.f32 %v432, %v442
        %v462 = vmul.f32 %v433, %v442
        %v463 = vmul.f32 %v434, %v442
        %v464 = vmul.f32 %v435, %v442
        %v465 = vmul.f32 %v436, %v442
        %v466 = vmul.f32 %v437, %v442
        %v467 = vmul.f32 %v438, %v442
        %v468 = vmul.f32 %v439, %v442
        %v469 = vmul.f32 %v440, %v442
        %v470 = vmul.f32 %v441, %v442
        %v471 = vadd.f32 %v386, %v443
        %v472 = vadd.f32 %v387, %v444
        %v473 = vadd.f32 %v388, %v445
        %v474 = vadd.f32 %v389, %v446
        %v475 = vadd.f32 %v390, %v447
        %v476 = vadd.f32 %v391, %v448
        %v477 = vadd.f32 %v392, %v449
        %v478 = vadd.f32 %v393, %v450
        %v479 = vadd.f32 %v394, %v451
        %v480 = vadd.f32 %v395, %v452
        %v481 = vadd.f32 %v396, %v453
        %v482 = vadd.f32 %v397, %v454
        %v483 = vadd.f32 %v398, %v455
        %v484 = vadd.f32 %v399, %v456
        %v485 = vadd.f32 %v400, %v457
        %v486 = vadd.f32 %v401, %v458
        %v487 = vadd.f32 %v402, %v459
        %v488 = vadd.f32 %v403, %v460
        %v489 = vadd.f32 %v404, %v461
        %v490 = vadd.f32 %v405, %v462
        %v491 = vadd.f32 %v406, %v463
        %v492 = vadd.f32 %v407, %v464
        %v493 = vadd.f32 %v408, %v465
        %v494 = vadd.f32 %v409, %v466
        %v495 = vadd.f32 %v410, %v467
        %v496 = vadd.f32 %v411, %v468
        %v497 = vadd.f32 %v412, %v469
        %v498 = vadd.f32 %v413, %v470
        %s499 = sadd.s32 %s238, 1
        %s500 = smul.u32 %s499, 24
        %s501 = scalar_lea.vmem %s236, %s500
        %v502 = vld [vmem:[%s501] sm:$0xff]
        %v503 = vld [vmem:[%s501 + $0x8] sm:$0xff]
        %v504 = vld [vmem:[%s501 + $0x18] sm:$0xff]
        %v505 = vld [vmem:[%s501 + $0x20] sm:$0xff]
        %v506 = vld [vmem:[%s501 + $0x30] sm:$0xff]
        %v507 = vld [vmem:[%s501 + $0x38] sm:$0xff]
        %v508 = vld [vmem:[%s501 + $0x48] sm:$0xff]
        %v509 = vld [vmem:[%s501 + $0x50] sm:$0xff]
        %v510 = vld [vmem:[%s501 + $0x60] sm:$0xff]
        %v511 = vld [vmem:[%s501 + $0x68] sm:$0xff]
        %v512 = vld [vmem:[%s501 + $0x78] sm:$0xff]
        %v513 = vld [vmem:[%s501 + $0x80] sm:$0xff]
        %v514 = vld [vmem:[%s501 + $0x90] sm:$0xff]
        %v515 = vld [vmem:[%s501 + $0x98] sm:$0xff]
        %v516 = vld [vmem:[%s501 + $0xa8] sm:$0xff]
        %v517 = vld [vmem:[%s501 + $0xb0] sm:$0xff]
        %v518 = vld [vmem:[%s501 + $0xc0] sm:$0xff]
        %v519 = vld [vmem:[%s501 + $0xc8] sm:$0xff]
        %v520 = vld [vmem:[%s501 + $0xd8] sm:$0xff]
        %v521 = vld [vmem:[%s501 + $0xe0] sm:$0xff]
        %v522 = vld [vmem:[%s501 + $0xf0] sm:$0xff]
        %v523 = vld [vmem:[%s501 + $0xf8] sm:$0xff]
        %v524 = vld [vmem:[%s501 + $0x108] sm:$0xff]
        %v525 = vld [vmem:[%s501 + $0x110] sm:$0xff]
        %v526 = vld [vmem:[%s501 + $0x120] sm:$0xff]
        %v527 = vld [vmem:[%s501 + $0x128] sm:$0xff]
        %v528 = vld [vmem:[%s501 + $0x138] sm:$0xff]
        %v529 = vld [vmem:[%s501 + $0x140] sm:$0xff]
        %v530 = vperm.slane %v240, 0
        %v531 = vmul.f32 %v502, %v530
        %v532 = vmul.f32 %v503, %v530
        %v533 = vmul.f32 %v504, %v530
        %v534 = vmul.f32 %v505, %v530
        %v535 = vmul.f32 %v506, %v530
        %v536 = vmul.f32 %v507, %v530
        %v537 = vmul.f32 %v508, %v530
        %v538 = vmul.f32 %v509, %v530
        %v539 = vmul.f32 %v510, %v530
        %v540 = vmul.f32 %v511, %v530
        %v541 = vmul.f32 %v512, %v530
        %v542 = vmul.f32 %v513, %v530
        %v543 = vmul.f32 %v514, %v530
        %v544 = vmul.f32 %v515, %v530
        %v545 = vmul.f32 %v516, %v530
        %v546 = vmul.f32 %v517, %v530
        %v547 = vmul.f32 %v518, %v530
        %v548 = vmul.f32 %v519, %v530
        %v549 = vmul.f32 %v520, %v530
        %v550 = vmul.f32 %v521, %v530
        %v551 = vmul.f32 %v522, %v530
        %v552 = vmul.f32 %v523, %v530
        %v553 = vmul.f32 %v524, %v530
        %v554 = vmul.f32 %v525, %v530
        %v555 = vmul.f32 %v526, %v530
        %v556 = vmul.f32 %v527, %v530
        %v557 = vmul.f32 %v528, %v530
        %v558 = vmul.f32 %v529, %v530
        %v559 = vadd.f32 %v471, %v531
        %v560 = vadd.f32 %v472, %v532
        %v561 = vadd.f32 %v473, %v533
        %v562 = vadd.f32 %v474, %v534
        %v563 = vadd.f32 %v475, %v535
        %v564 = vadd.f32 %v476, %v536
        %v565 = vadd.f32 %v477, %v537
        %v566 = vadd.f32 %v478, %v538
        %v567 = vadd.f32 %v479, %v539
        %v568 = vadd.f32 %v480, %v540
        %v569 = vadd.f32 %v481, %v541
        %v570 = vadd.f32 %v482, %v542
        %v571 = vadd.f32 %v483, %v543
        %v572 = vadd.f32 %v484, %v544
        %v573 = vadd.f32 %v485, %v545
        %v574 = vadd.f32 %v486, %v546
        %v575 = vadd.f32 %v487, %v547
        %v576 = vadd.f32 %v488, %v548
        %v577 = vadd.f32 %v489, %v549
        %v578 = vadd.f32 %v490, %v550
        %v579 = vadd.f32 %v491, %v551
        %v580 = vadd.f32 %v492, %v552
        %v581 = vadd.f32 %v493, %v553
        %v582 = vadd.f32 %v494, %v554
        %v583 = vadd.f32 %v495, %v555
        %v584 = vadd.f32 %v496, %v556
        %v585 = vadd.f32 %v497, %v557
        %v586 = vadd.f32 %v498, %v558
        %v587 = vld [vmem:[%s501 + $0x1] sm:$0xff]
        %v588 = vld [vmem:[%s501 + $0x9] sm:$0xff]
        %v589 = vld [vmem:[%s501 + $0x19] sm:$0xff]
        %v590 = vld [vmem:[%s501 + $0x21] sm:$0xff]
        %v591 = vld [vmem:[%s501 + $0x31] sm:$0xff]
        %v592 = vld [vmem:[%s501 + $0x39] sm:$0xff]
        %v593 = vld [vmem:[%s501 + $0x49] sm:$0xff]
        %v594 = vld [vmem:[%s501 + $0x51] sm:$0xff]
        %v595 = vld [vmem:[%s501 + $0x61] sm:$0xff]
        %v596 = vld [vmem:[%s501 + $0x69] sm:$0xff]
        %v597 = vld [vmem:[%s501 + $0x79] sm:$0xff]
        %v598 = vld [vmem:[%s501 + $0x81] sm:$0xff]
        %v599 = vld [vmem:[%s501 + $0x91] sm:$0xff]
        %v600 = vld [vmem:[%s501 + $0x99] sm:$0xff]
        %v601 = vld [vmem:[%s501 + $0xa9] sm:$0xff]
        %v602 = vld [vmem:[%s501 + $0xb1] sm:$0xff]
        %v603 = vld [vmem:[%s501 + $0xc1] sm:$0xff]
        %v604 = vld [vmem:[%s501 + $0xc9] sm:$0xff]
        %v605 = vld [vmem:[%s501 + $0xd9] sm:$0xff]
        %v606 = vld [vmem:[%s501 + $0xe1] sm:$0xff]
        %v607 = vld [vmem:[%s501 + $0xf1] sm:$0xff]
        %v608 = vld [vmem:[%s501 + $0xf9] sm:$0xff]
        %v609 = vld [vmem:[%s501 + $0x109] sm:$0xff]
        %v610 = vld [vmem:[%s501 + $0x111] sm:$0xff]
        %v611 = vld [vmem:[%s501 + $0x121] sm:$0xff]
        %v612 = vld [vmem:[%s501 + $0x129] sm:$0xff]
        %v613 = vld [vmem:[%s501 + $0x139] sm:$0xff]
        %v614 = vld [vmem:[%s501 + $0x141] sm:$0xff]
        %v615 = vperm.slane %v240, 1
        %v616 = vmul.f32 %v587, %v615
        %v617 = vmul.f32 %v588, %v615
        %v618 = vmul.f32 %v589, %v615
        %v619 = vmul.f32 %v590, %v615
        %v620 = vmul.f32 %v591, %v615
        %v621 = vmul.f32 %v592, %v615
        %v622 = vmul.f32 %v593, %v615
        %v623 = vmul.f32 %v594, %v615
        %v624 = vmul.f32 %v595, %v615
        %v625 = vmul.f32 %v596, %v615
        %v626 = vmul.f32 %v597, %v615
        %v627 = vmul.f32 %v598, %v615
        %v628 = vmul.f32 %v599, %v615
        %v629 = vmul.f32 %v600, %v615
        %v630 = vmul.f32 %v601, %v615
        %v631 = vmul.f32 %v602, %v615
        %v632 = vmul.f32 %v603, %v615
        %v633 = vmul.f32 %v604, %v615
        %v634 = vmul.f32 %v605, %v615
        %v635 = vmul.f32 %v606, %v615
        %v636 = vmul.f32 %v607, %v615
        %v637 = vmul.f32 %v608, %v615
        %v638 = vmul.f32 %v609, %v615
        %v639 = vmul.f32 %v610, %v615
        %v640 = vmul.f32 %v611, %v615
        %v641 = vmul.f32 %v612, %v615
        %v642 = vmul.f32 %v613, %v615
        %v643 = vmul.f32 %v614, %v615
        %v644 = vadd.f32 %v559, %v616
        %v645 = vadd.f32 %v560, %v617
        %v646 = vadd.f32 %v561, %v618
        %v647 = vadd.f32 %v562, %v619
        %v648 = vadd.f32 %v563, %v620
        %v649 = vadd.f32 %v564, %v621
        %v650 = vadd.f32 %v565, %v622
        %v651 = vadd.f32 %v566, %v623
        %v652 = vadd.f32 %v567, %v624
        %v653 = vadd.f32 %v568, %v625
        %v654 = vadd.f32 %v569, %v626
        %v655 = vadd.f32 %v570, %v627
        %v656 = vadd.f32 %v571, %v628
        %v657 = vadd.f32 %v572, %v629
        %v658 = vadd.f32 %v573, %v630
        %v659 = vadd.f32 %v574, %v631
        %v660 = vadd.f32 %v575, %v632
        %v661 = vadd.f32 %v576, %v633
        %v662 = vadd.f32 %v577, %v634
        %v663 = vadd.f32 %v578, %v635
        %v664 = vadd.f32 %v579, %v636
        %v665 = vadd.f32 %v580, %v637
        %v666 = vadd.f32 %v581, %v638
        %v667 = vadd.f32 %v582, %v639
        %v668 = vadd.f32 %v583, %v640
        %v669 = vadd.f32 %v584, %v641
        %v670 = vadd.f32 %v585, %v642
        %v671 = vadd.f32 %v586, %v643
        %v672 = vld [vmem:[%s501 + $0x2] sm:$0xff]
        %v673 = vld [vmem:[%s501 + $0xa] sm:$0xff]
        %v674 = vld [vmem:[%s501 + $0x1a] sm:$0xff]
        %v675 = vld [vmem:[%s501 + $0x22] sm:$0xff]
        %v676 = vld [vmem:[%s501 + $0x32] sm:$0xff]
        %v677 = vld [vmem:[%s501 + $0x3a] sm:$0xff]
        %v678 = vld [vmem:[%s501 + $0x4a] sm:$0xff]
        %v679 = vld [vmem:[%s501 + $0x52] sm:$0xff]
        %v680 = vld [vmem:[%s501 + $0x62] sm:$0xff]
        %v681 = vld [vmem:[%s501 + $0x6a] sm:$0xff]
        %v682 = vld [vmem:[%s501 + $0x7a] sm:$0xff]
        %v683 = vld [vmem:[%s501 + $0x82] sm:$0xff]
        %v684 = vld [vmem:[%s501 + $0x92] sm:$0xff]
        %v685 = vld [vmem:[%s501 + $0x9a] sm:$0xff]
        %v686 = vld [vmem:[%s501 + $0xaa] sm:$0xff]
        %v687 = vld [vmem:[%s501 + $0xb2] sm:$0xff]
        %v688 = vld [vmem:[%s501 + $0xc2] sm:$0xff]
        %v689 = vld [vmem:[%s501 + $0xca] sm:$0xff]
        %v690 = vld [vmem:[%s501 + $0xda] sm:$0xff]
        %v691 = vld [vmem:[%s501 + $0xe2] sm:$0xff]
        %v692 = vld [vmem:[%s501 + $0xf2] sm:$0xff]
        %v693 = vld [vmem:[%s501 + $0xfa] sm:$0xff]
        %v694 = vld [vmem:[%s501 + $0x10a] sm:$0xff]
        %v695 = vld [vmem:[%s501 + $0x112] sm:$0xff]
        %v696 = vld [vmem:[%s501 + $0x122] sm:$0xff]
        %v697 = vld [vmem:[%s501 + $0x12a] sm:$0xff]
        %v698 = vld [vmem:[%s501 + $0x13a] sm:$0xff]
        %v699 = vld [vmem:[%s501 + $0x142] sm:$0xff]
        %v700 = vperm.slane %v240, 2
        %v701 = vmul.f32 %v672, %v700
        %v702 = vmul.f32 %v673, %v700
        %v703 = vmul.f32 %v674, %v700
        %v704 = vmul.f32 %v675, %v700
        %v705 = vmul.f32 %v676, %v700
        %v706 = vmul.f32 %v677, %v700
        %v707 = vmul.f32 %v678, %v700
        %v708 = vmul.f32 %v679, %v700
        %v709 = vmul.f32 %v680, %v700
        %v710 = vmul.f32 %v681, %v700
        %v711 = vmul.f32 %v682, %v700
        %v712 = vmul.f32 %v683, %v700
        %v713 = vmul.f32 %v684, %v700
        %v714 = vmul.f32 %v685, %v700
        %v715 = vmul.f32 %v686, %v700
        %v716 = vmul.f32 %v687, %v700
        %v717 = vmul.f32 %v688, %v700
        %v718 = vmul.f32 %v689, %v700
        %v719 = vmul.f32 %v690, %v700
        %v720 = vmul.f32 %v691, %v700
        %v721 = vmul.f32 %v692, %v700
        %v722 = vmul.f32 %v693, %v700
        %v723 = vmul.f32 %v694, %v700
        %v724 = vmul.f32 %v695, %v700
        %v725 = vmul.f32 %v696, %v700
        %v726 = vmul.f32 %v697, %v700
        %v727 = vmul.f32 %v698, %v700
        %v728 = vmul.f32 %v699, %v700
        %v729 = vadd.f32 %v644, %v701
        %v730 = vadd.f32 %v645, %v702
        %v731 = vadd.f32 %v646, %v703
        %v732 = vadd.f32 %v647, %v704
        %v733 = vadd.f32 %v648, %v705
        %v734 = vadd.f32 %v649, %v706
        %v735 = vadd.f32 %v650, %v707
        %v736 = vadd.f32 %v651, %v708
        %v737 = vadd.f32 %v652, %v709
        %v738 = vadd.f32 %v653, %v710
        %v739 = vadd.f32 %v654, %v711
        %v740 = vadd.f32 %v655, %v712
        %v741 = vadd.f32 %v656, %v713
        %v742 = vadd.f32 %v657, %v714
        %v743 = vadd.f32 %v658, %v715
        %v744 = vadd.f32 %v659, %v716
        %v745 = vadd.f32 %v660, %v717
        %v746 = vadd.f32 %v661, %v718
        %v747 = vadd.f32 %v662, %v719
        %v748 = vadd.f32 %v663, %v720
        %v749 = vadd.f32 %v664, %v721
        %v750 = vadd.f32 %v665, %v722
        %v751 = vadd.f32 %v666, %v723
        %v752 = vadd.f32 %v667, %v724
        %v753 = vadd.f32 %v668, %v725
        %v754 = vadd.f32 %v669, %v726
        %v755 = vadd.f32 %v670, %v727
        %v756 = vadd.f32 %v671, %v728
        %s757 = sadd.s32 %s238, 2
        %s758 = smul.u32 %s757, 24
        %s759 = scalar_lea.vmem %s236, %s758
        %v760 = vld [vmem:[%s759] sm:$0xff]
        %v761 = vld [vmem:[%s759 + $0x8] sm:$0xff]
        %v762 = vld [vmem:[%s759 + $0x18] sm:$0xff]
        %v763 = vld [vmem:[%s759 + $0x20] sm:$0xff]
        %v764 = vld [vmem:[%s759 + $0x30] sm:$0xff]
        %v765 = vld [vmem:[%s759 + $0x38] sm:$0xff]
        %v766 = vld [vmem:[%s759 + $0x48] sm:$0xff]
        %v767 = vld [vmem:[%s759 + $0x50] sm:$0xff]
        %v768 = vld [vmem:[%s759 + $0x60] sm:$0xff]
        %v769 = vld [vmem:[%s759 + $0x68] sm:$0xff]
        %v770 = vld [vmem:[%s759 + $0x78] sm:$0xff]
        %v771 = vld [vmem:[%s759 + $0x80] sm:$0xff]
        %v772 = vld [vmem:[%s759 + $0x90] sm:$0xff]
        %v773 = vld [vmem:[%s759 + $0x98] sm:$0xff]
        %v774 = vld [vmem:[%s759 + $0xa8] sm:$0xff]
        %v775 = vld [vmem:[%s759 + $0xb0] sm:$0xff]
        %v776 = vld [vmem:[%s759 + $0xc0] sm:$0xff]
        %v777 = vld [vmem:[%s759 + $0xc8] sm:$0xff]
        %v778 = vld [vmem:[%s759 + $0xd8] sm:$0xff]
        %v779 = vld [vmem:[%s759 + $0xe0] sm:$0xff]
        %v780 = vld [vmem:[%s759 + $0xf0] sm:$0xff]
        %v781 = vld [vmem:[%s759 + $0xf8] sm:$0xff]
        %v782 = vld [vmem:[%s759 + $0x108] sm:$0xff]
        %v783 = vld [vmem:[%s759 + $0x110] sm:$0xff]
        %v784 = vld [vmem:[%s759 + $0x120] sm:$0xff]
        %v785 = vld [vmem:[%s759 + $0x128] sm:$0xff]
        %v786 = vld [vmem:[%s759 + $0x138] sm:$0xff]
        %v787 = vld [vmem:[%s759 + $0x140] sm:$0xff]
        %v788 = vperm.slane %v241, 0
        %v789 = vmul.f32 %v760, %v788
        %v790 = vmul.f32 %v761, %v788
        %v791 = vmul.f32 %v762, %v788
        %v792 = vmul.f32 %v763, %v788
        %v793 = vmul.f32 %v764, %v788
        %v794 = vmul.f32 %v765, %v788
        %v795 = vmul.f32 %v766, %v788
        %v796 = vmul.f32 %v767, %v788
        %v797 = vmul.f32 %v768, %v788
        %v798 = vmul.f32 %v769, %v788
        %v799 = vmul.f32 %v770, %v788
        %v800 = vmul.f32 %v771, %v788
        %v801 = vmul.f32 %v772, %v788
        %v802 = vmul.f32 %v773, %v788
        %v803 = vmul.f32 %v774, %v788
        %v804 = vmul.f32 %v775, %v788
        %v805 = vmul.f32 %v776, %v788
        %v806 = vmul.f32 %v777, %v788
        %v807 = vmul.f32 %v778, %v788
        %v808 = vmul.f32 %v779, %v788
        %v809 = vmul.f32 %v780, %v788
        %v810 = vmul.f32 %v781, %v788
        %v811 = vmul.f32 %v782, %v788
        %v812 = vmul.f32 %v783, %v788
        %v813 = vmul.f32 %v784, %v788
        %v814 = vmul.f32 %v785, %v788
        %v815 = vmul.f32 %v786, %v788
        %v816 = vmul.f32 %v787, %v788
        %v817 = vadd.f32 %v729, %v789
        %v818 = vadd.f32 %v730, %v790
        %v819 = vadd.f32 %v731, %v791
        %v820 = vadd.f32 %v732, %v792
        %v821 = vadd.f32 %v733, %v793
        %v822 = vadd.f32 %v734, %v794
        %v823 = vadd.f32 %v735, %v795
        %v824 = vadd.f32 %v736, %v796
        %v825 = vadd.f32 %v737, %v797
        %v826 = vadd.f32 %v738, %v798
        %v827 = vadd.f32 %v739, %v799
        %v828 = vadd.f32 %v740, %v800
        %v829 = vadd.f32 %v741, %v801
        %v830 = vadd.f32 %v742, %v802
        %v831 = vadd.f32 %v743, %v803
        %v832 = vadd.f32 %v744, %v804
        %v833 = vadd.f32 %v745, %v805
        %v834 = vadd.f32 %v746, %v806
        %v835 = vadd.f32 %v747, %v807
        %v836 = vadd.f32 %v748, %v808
        %v837 = vadd.f32 %v749, %v809
        %v838 = vadd.f32 %v750, %v810
        %v839 = vadd.f32 %v751, %v811
        %v840 = vadd.f32 %v752, %v812
        %v841 = vadd.f32 %v753, %v813
        %v842 = vadd.f32 %v754, %v814
        %v843 = vadd.f32 %v755, %v815
        %v844 = vadd.f32 %v756, %v816
        %v845 = vld [vmem:[%s759 + $0x1] sm:$0xff]
        %v846 = vld [vmem:[%s759 + $0x9] sm:$0xff]
        %v847 = vld [vmem:[%s759 + $0x19] sm:$0xff]
        %v848 = vld [vmem:[%s759 + $0x21] sm:$0xff]
        %v849 = vld [vmem:[%s759 + $0x31] sm:$0xff]
        %v850 = vld [vmem:[%s759 + $0x39] sm:$0xff]
        %v851 = vld [vmem:[%s759 + $0x49] sm:$0xff]
        %v852 = vld [vmem:[%s759 + $0x51] sm:$0xff]
        %v853 = vld [vmem:[%s759 + $0x61] sm:$0xff]
        %v854 = vld [vmem:[%s759 + $0x69] sm:$0xff]
        %v855 = vld [vmem:[%s759 + $0x79] sm:$0xff]
        %v856 = vld [vmem:[%s759 + $0x81] sm:$0xff]
        %v857 = vld [vmem:[%s759 + $0x91] sm:$0xff]
        %v858 = vld [vmem:[%s759 + $0x99] sm:$0xff]
        %v859 = vld [vmem:[%s759 + $0xa9] sm:$0xff]
        %v860 = vld [vmem:[%s759 + $0xb1] sm:$0xff]
        %v861 = vld [vmem:[%s759 + $0xc1] sm:$0xff]
        %v862 = vld [vmem:[%s759 + $0xc9] sm:$0xff]
        %v863 = vld [vmem:[%s759 + $0xd9] sm:$0xff]
        %v864 = vld [vmem:[%s759 + $0xe1] sm:$0xff]
        %v865 = vld [vmem:[%s759 + $0xf1] sm:$0xff]
        %v866 = vld [vmem:[%s759 + $0xf9] sm:$0xff]
        %v867 = vld [vmem:[%s759 + $0x109] sm:$0xff]
        %v868 = vld [vmem:[%s759 + $0x111] sm:$0xff]
        %v869 = vld [vmem:[%s759 + $0x121] sm:$0xff]
        %v870 = vld [vmem:[%s759 + $0x129] sm:$0xff]
        %v871 = vld [vmem:[%s759 + $0x139] sm:$0xff]
        %v872 = vld [vmem:[%s759 + $0x141] sm:$0xff]
        %v873 = vperm.slane %v241, 1
        %v874 = vmul.f32 %v845, %v873
        %v875 = vmul.f32 %v846, %v873
        %v876 = vmul.f32 %v847, %v873
        %v877 = vmul.f32 %v848, %v873
        %v878 = vmul.f32 %v849, %v873
        %v879 = vmul.f32 %v850, %v873
        %v880 = vmul.f32 %v851, %v873
        %v881 = vmul.f32 %v852, %v873
        %v882 = vmul.f32 %v853, %v873
        %v883 = vmul.f32 %v854, %v873
        %v884 = vmul.f32 %v855, %v873
        %v885 = vmul.f32 %v856, %v873
        %v886 = vmul.f32 %v857, %v873
        %v887 = vmul.f32 %v858, %v873
        %v888 = vmul.f32 %v859, %v873
        %v889 = vmul.f32 %v860, %v873
        %v890 = vmul.f32 %v861, %v873
        %v891 = vmul.f32 %v862, %v873
        %v892 = vmul.f32 %v863, %v873
        %v893 = vmul.f32 %v864, %v873
        %v894 = vmul.f32 %v865, %v873
        %v895 = vmul.f32 %v866, %v873
        %v896 = vmul.f32 %v867, %v873
        %v897 = vmul.f32 %v868, %v873
        %v898 = vmul.f32 %v869, %v873
        %v899 = vmul.f32 %v870, %v873
        %v900 = vmul.f32 %v871, %v873
        %v901 = vmul.f32 %v872, %v873
        %v902 = vadd.f32 %v817, %v874
        %v903 = vadd.f32 %v818, %v875
        %v904 = vadd.f32 %v819, %v876
        %v905 = vadd.f32 %v820, %v877
        %v906 = vadd.f32 %v821, %v878
        %v907 = vadd.f32 %v822, %v879
        %v908 = vadd.f32 %v823, %v880
        %v909 = vadd.f32 %v824, %v881
        %v910 = vadd.f32 %v825, %v882
        %v911 = vadd.f32 %v826, %v883
        %v912 = vadd.f32 %v827, %v884
        %v913 = vadd.f32 %v828, %v885
        %v914 = vadd.f32 %v829, %v886
        %v915 = vadd.f32 %v830, %v887
        %v916 = vadd.f32 %v831, %v888
        %v917 = vadd.f32 %v832, %v889
        %v918 = vadd.f32 %v833, %v890
        %v919 = vadd.f32 %v834, %v891
        %v920 = vadd.f32 %v835, %v892
        %v921 = vadd.f32 %v836, %v893
        %v922 = vadd.f32 %v837, %v894
        %v923 = vadd.f32 %v838, %v895
        %v924 = vadd.f32 %v839, %v896
        %v925 = vadd.f32 %v840, %v897
        %v926 = vadd.f32 %v841, %v898
        %v927 = vadd.f32 %v842, %v899
        %v928 = vadd.f32 %v843, %v900
        %v929 = vadd.f32 %v844, %v901
        %v930 = vld [vmem:[%s759 + $0x2] sm:$0xff]
        %v931 = vld [vmem:[%s759 + $0xa] sm:$0xff]
        %v932 = vld [vmem:[%s759 + $0x1a] sm:$0xff]
        %v933 = vld [vmem:[%s759 + $0x22] sm:$0xff]
        %v934 = vld [vmem:[%s759 + $0x32] sm:$0xff]
        %v935 = vld [vmem:[%s759 + $0x3a] sm:$0xff]
        %v936 = vld [vmem:[%s759 + $0x4a] sm:$0xff]
        %v937 = vld [vmem:[%s759 + $0x52] sm:$0xff]
        %v938 = vld [vmem:[%s759 + $0x62] sm:$0xff]
        %v939 = vld [vmem:[%s759 + $0x6a] sm:$0xff]
        %v940 = vld [vmem:[%s759 + $0x7a] sm:$0xff]
        %v941 = vld [vmem:[%s759 + $0x82] sm:$0xff]
        %v942 = vld [vmem:[%s759 + $0x92] sm:$0xff]
        %v943 = vld [vmem:[%s759 + $0x9a] sm:$0xff]
        %v944 = vld [vmem:[%s759 + $0xaa] sm:$0xff]
        %v945 = vld [vmem:[%s759 + $0xb2] sm:$0xff]
        %v946 = vld [vmem:[%s759 + $0xc2] sm:$0xff]
        %v947 = vld [vmem:[%s759 + $0xca] sm:$0xff]
        %v948 = vld [vmem:[%s759 + $0xda] sm:$0xff]
        %v949 = vld [vmem:[%s759 + $0xe2] sm:$0xff]
        %v950 = vld [vmem:[%s759 + $0xf2] sm:$0xff]
        %v951 = vld [vmem:[%s759 + $0xfa] sm:$0xff]
        %v952 = vld [vmem:[%s759 + $0x10a] sm:$0xff]
        %v953 = vld [vmem:[%s759 + $0x112] sm:$0xff]
        %v954 = vld [vmem:[%s759 + $0x122] sm:$0xff]
        %v955 = vld [vmem:[%s759 + $0x12a] sm:$0xff]
        %v956 = vld [vmem:[%s759 + $0x13a] sm:$0xff]
        %v957 = vld [vmem:[%s759 + $0x142] sm:$0xff]
        %v958 = vperm.slane %v241, 2
        %v959 = vmul.f32 %v930, %v958
        %v960 = vmul.f32 %v931, %v958
        %v961 = vmul.f32 %v932, %v958
        %v962 = vmul.f32 %v933, %v958
        %v963 = vmul.f32 %v934, %v958
        %v964 = vmul.f32 %v935, %v958
        %v965 = vmul.f32 %v936, %v958
        %v966 = vmul.f32 %v937, %v958
        %v967 = vmul.f32 %v938, %v958
        %v968 = vmul.f32 %v939, %v958
        %v969 = vmul.f32 %v940, %v958
        %v970 = vmul.f32 %v941, %v958
        %v971 = vmul.f32 %v942, %v958
        %v972 = vmul.f32 %v943, %v958
        %v973 = vmul.f32 %v944, %v958
        %v974 = vmul.f32 %v945, %v958
        %v975 = vmul.f32 %v946, %v958
        %v976 = vmul.f32 %v947, %v958
        %v977 = vmul.f32 %v948, %v958
        %v978 = vmul.f32 %v949, %v958
        %v979 = vmul.f32 %v950, %v958
        %v980 = vmul.f32 %v951, %v958
        %v981 = vmul.f32 %v952, %v958
        %v982 = vmul.f32 %v953, %v958
        %v983 = vmul.f32 %v954, %v958
        %v984 = vmul.f32 %v955, %v958
        %v985 = vmul.f32 %v956, %v958
        %v986 = vmul.f32 %v957, %v958
        %v987 = vadd.f32 %v902, %v959
        %v988 = vadd.f32 %v903, %v960
        %v989 = vadd.f32 %v904, %v961
        %v990 = vadd.f32 %v905, %v962
        %v991 = vadd.f32 %v906, %v963
        %v992 = vadd.f32 %v907, %v964
        %v993 = vadd.f32 %v908, %v965
        %v994 = vadd.f32 %v909, %v966
        %v995 = vadd.f32 %v910, %v967
        %v996 = vadd.f32 %v911, %v968
        %v997 = vadd.f32 %v912, %v969
        %v998 = vadd.f32 %v913, %v970
        %v999 = vadd.f32 %v914, %v971
        %v1000 = vadd.f32 %v915, %v972
        %v1001 = vadd.f32 %v916, %v973
        %v1002 = vadd.f32 %v917, %v974
        %v1003 = vadd.f32 %v918, %v975
        %v1004 = vadd.f32 %v919, %v976
        %v1005 = vadd.f32 %v920, %v977
        %v1006 = vadd.f32 %v921, %v978
        %v1007 = vadd.f32 %v922, %v979
        %v1008 = vadd.f32 %v923, %v980
        %v1009 = vadd.f32 %v924, %v981
        %v1010 = vadd.f32 %v925, %v982
        %v1011 = vadd.f32 %v926, %v983
        %v1012 = vadd.f32 %v927, %v984
        %v1013 = vadd.f32 %v928, %v985
        %v1014 = vadd.f32 %v929, %v986
        %v1015 = vld [vmem:[%s2] sm:$0x1]
        %v1017 = vperm.slane %v1015, 0
        %v1019 = vadd.f32 %v987, %v1017
        %v1020 = vadd.f32 %v988, %v1017
        %v1021 = vadd.f32 %v989, %v1017
        %v1022 = vadd.f32 %v990, %v1017
        %v1023 = vadd.f32 %v991, %v1017
        %v1024 = vadd.f32 %v992, %v1017
        %v1025 = vadd.f32 %v993, %v1017
        %v1026 = vadd.f32 %v994, %v1017
        %v1027 = vadd.f32 %v995, %v1017
        %v1028 = vadd.f32 %v996, %v1017
        %v1029 = vadd.f32 %v997, %v1017
        %v1030 = vadd.f32 %v998, %v1017
        %v1031 = vadd.f32 %v999, %v1017
        %v1032 = vadd.f32 %v1000, %v1017
        %v1033 = vadd.f32 %v1001, %v1017
        %v1034 = vadd.f32 %v1002, %v1017
        %v1035 = vadd.f32 %v1003, %v1017
        %v1036 = vadd.f32 %v1004, %v1017
        %v1037 = vadd.f32 %v1005, %v1017
        %v1038 = vadd.f32 %v1006, %v1017
        %v1039 = vadd.f32 %v1007, %v1017
        %v1040 = vadd.f32 %v1008, %v1017
        %v1041 = vadd.f32 %v1009, %v1017
        %v1042 = vadd.f32 %v1010, %v1017
        %v1043 = vadd.f32 %v1011, %v1017
        %v1044 = vadd.f32 %v1012, %v1017
        %v1045 = vadd.f32 %v1013, %v1017
        %v1046 = vadd.f32 %v1014, %v1017
        %v1047 = vld [vmem:[%s3] sm:$0xf]
        %v1048 = vld [vmem:[%s4] sm:$0x1]
        %v1050 = vperm.slane %v1048, 0
        %vm1052 = vcmask 31744
        %v1054 = vsel %vm1052, %v1019, 0
        %v1057 = vsel %vm1052, %v1020, 0
        %v1060 = vsel %vm1052, %v1021, 0
        %v1063 = vsel %vm1052, %v1022, 0
        %v1066 = vsel %vm1052, %v1023, 0
        %v1069 = vsel %vm1052, %v1024, 0
        %v1072 = vsel %vm1052, %v1025, 0
        %v1075 = vsel %vm1052, %v1026, 0
        %v1078 = vsel %vm1052, %v1027, 0
        %v1081 = vsel %vm1052, %v1028, 0
        %v1084 = vsel %vm1052, %v1029, 0
        %v1087 = vsel %vm1052, %v1030, 0
        %v1090 = vsel %vm1052, %v1031, 0
        %v1093 = vsel %vm1052, %v1032, 0
        %v1096 = vsel %vm1052, %v1033, 0
        %v1099 = vsel %vm1052, %v1034, 0
        %v1102 = vsel %vm1052, %v1035, 0
        %v1105 = vsel %vm1052, %v1036, 0
        %v1108 = vsel %vm1052, %v1037, 0
        %v1111 = vsel %vm1052, %v1038, 0
        %v1114 = vsel %vm1052, %v1039, 0
        %v1117 = vsel %vm1052, %v1040, 0
        %v1120 = vsel %vm1052, %v1041, 0
        %v1123 = vsel %vm1052, %v1042, 0
        %v1126 = vsel %vm1052, %v1043, 0
        %v1129 = vsel %vm1052, %v1044, 0
        %v1132 = vsel %vm1052, %v1045, 0
        %v1135 = vsel %vm1052, %v1046, 0
        %vm1137 = vcmask 1043456
        %v1139 = vsel %vm1137, %v1047, 0
        %1141 = vmatpush.msra.mxu0 0.0
        %1142 = vmatpush.msra.mxu0 0.0
        %1143 = vmatpush.msra.mxu0 0.0
        %1144 = vmatpush.msra.mxu0 0.0
        %1145 = vmatpush.msra.mxu0 0.0
        %1146 = vmatpush.msra.mxu0 0.0
        %1147 = vmatpush.msra.mxu0 0.0
        %1148 = vmatpush.msra.mxu0 0.0
        %1149 = vmatpush.msra.mxu0 0.0
        %1150 = vmatpush.msra.mxu0 0.0
        %1151 = vmatpush.msra.mxu0 0.0
        %1152 = vmatpush.msra.mxu0 0.0
        %1153 = vmatpush.msra.mxu0 0.0
        %1154 = vmatpush.msra.mxu0 0.0
        %1155 = vmatpush.msra.mxu0 0.0
        %1156 = vmatpush.msra.mxu0 %v1139
        %1157 = vmatmul.f32.gmra.mxu0 %v1054
        %v1158 = vpop.f32.mrf.mxu0
        %v1159 = vadd.f32 %v1050, %v1158
        %1160 = vmatmul.f32.gmra.mxu0 %v1057
        %v1161 = vpop.f32.mrf.mxu0
        %v1162 = vadd.f32 %v1050, %v1161
        %1163 = vmatmul.f32.gmra.mxu0 %v1060
        %v1164 = vpop.f32.mrf.mxu0
        %v1165 = vadd.f32 %v1050, %v1164
        %1166 = vmatmul.f32.gmra.mxu0 %v1063
        %v1167 = vpop.f32.mrf.mxu0
        %v1168 = vadd.f32 %v1050, %v1167
        %1169 = vmatmul.f32.gmra.mxu0 %v1066
        %v1170 = vpop.f32.mrf.mxu0
        %v1171 = vadd.f32 %v1050, %v1170
        %1172 = vmatmul.f32.gmra.mxu0 %v1069
        %v1173 = vpop.f32.mrf.mxu0
        %v1174 = vadd.f32 %v1050, %v1173
        %1175 = vmatmul.f32.gmra.mxu0 %v1072
        %v1176 = vpop.f32.mrf.mxu0
        %v1177 = vadd.f32 %v1050, %v1176
        %1178 = vmatmul.f32.gmra.mxu0 %v1075
        %v1179 = vpop.f32.mrf.mxu0
        %v1180 = vadd.f32 %v1050, %v1179
        %1181 = vmatmul.f32.gmra.mxu0 %v1078
        %v1182 = vpop.f32.mrf.mxu0
        %v1183 = vadd.f32 %v1050, %v1182
        %1184 = vmatmul.f32.gmra.mxu0 %v1081
        %v1185 = vpop.f32.mrf.mxu0
        %v1186 = vadd.f32 %v1050, %v1185
        %1187 = vmatmul.f32.gmra.mxu0 %v1084
        %v1188 = vpop.f32.mrf.mxu0
        %v1189 = vadd.f32 %v1050, %v1188
        %1190 = vmatmul.f32.gmra.mxu0 %v1087
        %v1191 = vpop.f32.mrf.mxu0
        %v1192 = vadd.f32 %v1050, %v1191
        %1193 = vmatmul.f32.gmra.mxu0 %v1090
        %v1194 = vpop.f32.mrf.mxu0
        %v1195 = vadd.f32 %v1050, %v1194
        %1196 = vmatmul.f32.gmra.mxu0 %v1093
        %v1197 = vpop.f32.mrf.mxu0
        %v1198 = vadd.f32 %v1050, %v1197
        %1199 = vmatmul.f32.gmra.mxu0 %v1096
        %v1200 = vpop.f32.mrf.mxu0
        %v1201 = vadd.f32 %v1050, %v1200
        %1202 = vmatmul.f32.gmra.mxu0 %v1099
        %v1203 = vpop.f32.mrf.mxu0
        %v1204 = vadd.f32 %v1050, %v1203
        %1205 = vmatmul.f32.gmra.mxu0 %v1102
        %v1206 = vpop.f32.mrf.mxu0
        %v1207 = vadd.f32 %v1050, %v1206
        %1208 = vmatmul.f32.gmra.mxu0 %v1105
        %v1209 = vpop.f32.mrf.mxu0
        %v1210 = vadd.f32 %v1050, %v1209
        %1211 = vmatmul.f32.gmra.mxu0 %v1108
        %v1212 = vpop.f32.mrf.mxu0
        %v1213 = vadd.f32 %v1050, %v1212
        %1214 = vmatmul.f32.gmra.mxu0 %v1111
        %v1215 = vpop.f32.mrf.mxu0
        %v1216 = vadd.f32 %v1050, %v1215
        %1217 = vmatmul.f32.gmra.mxu0 %v1114
        %v1218 = vpop.f32.mrf.mxu0
        %v1219 = vadd.f32 %v1050, %v1218
        %1220 = vmatmul.f32.gmra.mxu0 %v1117
        %v1221 = vpop.f32.mrf.mxu0
        %v1222 = vadd.f32 %v1050, %v1221
        %1223 = vmatmul.f32.gmra.mxu0 %v1120
        %v1224 = vpop.f32.mrf.mxu0
        %v1225 = vadd.f32 %v1050, %v1224
        %1226 = vmatmul.f32.gmra.mxu0 %v1123
        %v1227 = vpop.f32.mrf.mxu0
        %v1228 = vadd.f32 %v1050, %v1227
        %1229 = vmatmul.f32.gmra.mxu0 %v1126
        %v1230 = vpop.f32.mrf.mxu0
        %v1231 = vadd.f32 %v1050, %v1230
        %1232 = vmatmul.f32.gmra.mxu0 %v1129
        %v1233 = vpop.f32.mrf.mxu0
        %v1234 = vadd.f32 %v1050, %v1233
        %1235 = vmatmul.f32.gmra.mxu0 %v1132
        %v1236 = vpop.f32.mrf.mxu0
        %v1237 = vadd.f32 %v1050, %v1236
        %1238 = vmatmul.f32.gmra.mxu0 %v1135
        %v1239 = vpop.f32.mrf.mxu0
        %v1240 = vadd.f32 %v1050, %v1239
        %1241 = vdwg.mxu0
        %1242 = vst [vmem:[%s231] sm:$0xff] %v1159
        %1243 = vst [vmem:[%s231 + $0x8] sm:$0xff] %v1162
        %1244 = vst [vmem:[%s231 + $0x10] sm:$0xff] %v1165
        %1245 = vst [vmem:[%s231 + $0x18] sm:$0xff] %v1168
        %1246 = vst [vmem:[%s231 + $0x20] sm:$0xff] %v1171
        %1247 = vst [vmem:[%s231 + $0x28] sm:$0xff] %v1174
        %1248 = vst [vmem:[%s231 + $0x30] sm:$0xff] %v1177
        %1249 = vst [vmem:[%s231 + $0x38] sm:$0xff] %v1180
        %1250 = vst [vmem:[%s231 + $0x40] sm:$0xff] %v1183
        %1251 = vst [vmem:[%s231 + $0x48] sm:$0xff] %v1186
        %1252 = vst [vmem:[%s231 + $0x50] sm:$0xff] %v1189
        %1253 = vst [vmem:[%s231 + $0x58] sm:$0xff] %v1192
        %1254 = vst [vmem:[%s231 + $0x60] sm:$0xff] %v1195
        %1255 = vst [vmem:[%s231 + $0x68] sm:$0xff] %v1198
        %1256 = vst [vmem:[%s231 + $0x70] sm:$0xff] %v1201
        %1257 = vst [vmem:[%s231 + $0x78] sm:$0xff] %v1204
        %1258 = vst [vmem:[%s231 + $0x80] sm:$0xff] %v1207
        %1259 = vst [vmem:[%s231 + $0x88] sm:$0xff] %v1210
        %1260 = vst [vmem:[%s231 + $0x90] sm:$0xff] %v1213
        %1261 = vst [vmem:[%s231 + $0x98] sm:$0xff] %v1216
        %1262 = vst [vmem:[%s231 + $0xa0] sm:$0xff] %v1219
        %1263 = vst [vmem:[%s231 + $0xa8] sm:$0xff] %v1222
        %1264 = vst [vmem:[%s231 + $0xb0] sm:$0xff] %v1225
        %1265 = vst [vmem:[%s231 + $0xb8] sm:$0xff] %v1228
        %1266 = vst [vmem:[%s231 + $0xc0] sm:$0xff] %v1231
        %1267 = vst [vmem:[%s231 + $0xc8] sm:$0xff] %v1234
        %1268 = vst [vmem:[%s231 + $0xd0] sm:$0xff] %v1237
        %1269 = vst [vmem:[%s231 + $0xd8] sm:$0xff] %v1240
        %s1270 = sand.u32 %s151, 1
        %s1271 = scalar_lea.sflag [#allocation3], %s1270
        %s1272 = sand.u32 %s151, 1
        %s1273 = smul.addr %s1272, 224
        %s1274 = scalar_lea.vmem [#allocation2], %s1273
        // Predicated region
        $region41: #{tpu_custom_call.1} parent=39 // pred_check
          %p1275 = pneg %p161
        $region42: #{tpu_custom_call.1} parent=39 // pred_check_branch
          %1277 = sbr.rel (%p1275) target = $region44
        $region43: #{tpu_custom_call.1} parent=39 // pred_region
          %s1278 = smul.u32 14, %s24
          %1280 = vsyncadd %s1271, 0
          %s1281 = smul.addr %s1278, 2
          %s1282 = smul.addr %s23, 28
          %s1283 = sadd.s32 %s1281, %s1282
          %s1284 = smul.addr %s1283, 8
          %s1285 = scalar_lea.hbm %s5, %s1284
          %s1286 = sshll.u32 %s1274, 4
          %s1287 = int_to_ptr.vmem [resolvable:$true] %s1286
          %s1288 = sshll.u32 %s1285, 4
          %s1289 = int_to_ptr.hbm [resolvable:$true] %s1288
          %1294 = dma.vmem_to_hbm [thread:$0]  %s1287, 3584, %s1289, %s1271, 128, 128, 8
        $region44: #{tpu_custom_call.1} parent=39 // pred_fallthru
          _
      $region40: #{tpu_custom_call.1} parent=5 // pred_fallthru
        _
      %p1295 = scmp.le.s32.totalorder 2, %s14
      // Predicated region
      $region45: #{tpu_custom_call.1} parent=5 // pred_check
        %p1296 = pneg %p1295
      $region46: #{tpu_custom_call.1} parent=5 // pred_check_branch
        %1298 = sbr.rel (%p1296) target = $region48
      $region47: #{tpu_custom_call.1} parent=5 // pred_region
        %s1299 = ssub.s32 %s14, 2
        // Predicated region
        $region49: #{tpu_custom_call.1} parent=47 // pred_check
          %p1300 = pneg %p167
        $region50: #{tpu_custom_call.1} parent=47 // pred_check_branch
          %1302 = sbr.rel (%p1300) target = $region52
        $region51: #{tpu_custom_call.1} parent=47 // pred_region
          %s1303 = sand.u32 %s152, 1
          %s1304 = scalar_lea.sflag [#allocation3], %s1303
          %s1305 = sand.u32 %s152, 1
          %s1306 = smul.addr %s1305, 224
          %s1307 = scalar_lea.vmem [#allocation2], %s1306
          %1309 = dma.done %s1304, 3584
        $region52: #{tpu_custom_call.1} parent=47 // pred_fallthru
          _
      $region48: #{tpu_custom_call.1} parent=5 // pred_fallthru
        _
    $region6: #{tpu_custom_call.1} parent=1 // loop_footer
      %s18 = sadd.s32 1, %s14
    $region7: #{tpu_custom_call.1} parent=1 // loop_footer_branch
      %13 = sbr.rel target = $region3
    $region8: #{tpu_custom_call.1} parent=1 // loop_exit
      _
    %1310 = vsyncpa [#allocation3], 1
    %s1311 = scalar_lea.sflag [#allocation3], 1
    %1312 = vsyncpa %s1311, 1

</llo_original>
